<compile_context>
chip_gen: v7x
topology: tpu7x:2x2x1
jax: 0.10.0
libtpu: 0.0.40
codegen_flags: <defaults>
</compile_context>

<pallas_src>
import jax
import jax.numpy as jnp
import numpy as np
from jax.experimental import pallas as pl
from jax.experimental.pallas import tpu as pltpu


# ----------------------------- Pallas kernel -------------------------------


def _silu(v):
    # silu(v) = v * sigmoid(v), with sigmoid(v) = 0.5 * (tanh(0.5 v) + 1).
    # Single EUP transcendental per activation; numerically safe for all v.
    return v * (0.5 * jnp.tanh(0.5 * v) + 0.5)


def _residual_layer_kernel(x_ref, w1_ref, w2_ref, b_ref, out_ref):
    f32 = jnp.float32
    x = x_ref[...]                                               # [tm, H] f32

    b1 = b_ref[0:1, :]                                           # [1, H] f32
    b2 = b_ref[1:2, :]                                           # [1, H] f32

    h = jnp.dot(x.astype(jnp.bfloat16), w1_ref[...],
                preferred_element_type=f32) + b1
    h = _silu(h)
    h = jnp.dot(h.astype(jnp.bfloat16), w2_ref[...],
                preferred_element_type=f32) + b2
    out_ref[...] = x + _silu(h)


# ------------------------------- wrapper ------------------------------------


def _round_up(v, m):
    return ((v + m - 1) // m) * m


def residual_layer(x, w1, b1, w2, b2, *, max_tile_m=1024):
    """x: [N, H] f32, w1/w2: [H, H] bf16, b1/b2: [1, H] f32 -> [N, H] f32."""
    N, H = x.shape

    # Row tile: as large as possible up to max_tile_m, but aim for >= 2 grid
    # steps (feeds both v7x TensorCores); keep a multiple of 8 sublanes.
    tile_m = _round_up(min(max_tile_m, pl.cdiv(N, 2)), 8)
    tile_m = min(tile_m, _round_up(N, 8))
    grid_m = pl.cdiv(N, tile_m)
    n_pad = grid_m * tile_m

    # Pad the ragged tail in the wrapper so every kernel tile is full and all
    # stores stay lane-dense / unmasked.  Padded rows are discarded below.
    if n_pad != N:
        x_in = jnp.zeros((n_pad, H), x.dtype).at[:N].set(x)
    else:
        x_in = x

    # Fold the two bias rows into one invariant (2, H) operand.
    b = jnp.concatenate([b1.reshape(1, H), b2.reshape(1, H)], axis=0)

    row_spec = pl.BlockSpec((tile_m, H), lambda i: (i, 0))
    w_spec = pl.BlockSpec((H, H), lambda i: (0, 0))
    b_spec = pl.BlockSpec((2, H), lambda i: (0, 0))
    # (pipeline_mode=pl.Buffered(1) on the invariant w/b specs would shave a
    #  second buffer, but at H=128 the weights are 32 KiB each — negligible.)

    # VMEM budget: x + out f32 row tiles, double-buffered, plus bf16 weights
    # and biases, with ~2x headroom; clamp well under v7x's 64 MiB.
    tile_bytes = tile_m * H * 4
    weight_bytes = 2 * H * H * 2 + 2 * H * 4
    vmem_bytes = 2 * 2 * tile_bytes + weight_bytes
    vmem_limit = int(min(max(2 * vmem_bytes, 16 << 20), 48 << 20))

    out = pl.pallas_call(
        _residual_layer_kernel,
        out_shape=jax.ShapeDtypeStruct((n_pad, H), jnp.float32),
        grid=(grid_m,),
        in_specs=[row_spec, w_spec, w_spec, b_spec],
        out_specs=row_spec,
        compiler_params=pltpu.CompilerParams(
            dimension_semantics=("parallel",),
            vmem_limit_bytes=vmem_limit,
        ),
    )(x_in, w1, w2, b)

    return out[:N] if n_pad != N else out


# ------------------------------ reference -----------------------------------


def _reference(x, w1, b1, w2, b2):
    # numpy f32 reference of: x + silu(lin2(silu(lin1(x))))
    sig = lambda v: 1.0 / (1.0 + np.exp(-v))
    silu = lambda v: v * sig(v)
    h = silu(x @ w1 + b1)
    h = silu(h @ w2 + b2)
    return x + h


# ---------------------------------- main -------------------------------------


if __name__ == "__main__":
    H = 128    # DimeNet++ default hidden_channels -> lane-dense 128-wide vregs
    N = 1000   # not a multiple of the row tile -> exercises the padding path

    key = jax.random.PRNGKey(0)
    k_w1, k_w2, k_x = jax.random.split(key, 3)

    # glorot_orthogonal(scale=2.0) stand-in: variance ~ 2*scale/(fan_in+fan_out)
    w_scale = np.sqrt(2.0 * 2.0 / (H + H))
    w1 = (w_scale * jax.random.normal(k_w1, (H, H), jnp.float32)).astype(jnp.bfloat16)
    w2 = (w_scale * jax.random.normal(k_w2, (H, H), jnp.float32)).astype(jnp.bfloat16)
    b1 = jnp.zeros((1, H), jnp.float32)   # biases zero per reset_parameters()
    b2 = jnp.zeros((1, H), jnp.float32)

    x = jax.random.normal(k_x, (N, H), jnp.float32)

    out = jax.block_until_ready(residual_layer(x, w1, b1, w2, b2))

    # Reference uses the same (bf16-quantized) weights upcast to f32, so the
    # comparison only measures the bf16 activation cast inside the kernel.
    ref = _reference(
        np.asarray(x),
        np.asarray(w1.astype(jnp.float32)), np.asarray(b1),
        np.asarray(w2.astype(jnp.float32)), np.asarray(b2),
    )

    assert out.shape == (N, H) and out.dtype == jnp.float32
    np.testing.assert_allclose(np.asarray(out), ref, rtol=2e-2, atol=2e-2)

    print("KERNEL_OK")
</pallas_src>

<mosaic_0001>
module attributes {stable_mosaic.version = 11 : i64} {
  func.func @_residual_layer_kernel(%arg0: i32, %arg1: memref<504x128xf32, #tpu.memory_space<vmem>>, %arg2: memref<128x128xbf16, #tpu.memory_space<vmem>>, %arg3: memref<128x128xbf16, #tpu.memory_space<vmem>>, %arg4: memref<2x128xf32, #tpu.memory_space<vmem>>, %arg5: memref<504x128xf32, #tpu.memory_space<vmem>>) attributes {dimension_semantics = [#tpu.dimension_semantics<parallel>], iteration_bounds = array<i64: 2>, scalar_prefetch = 0 : i64, scratch_operands = 0 : i64, tpu.core_type = #tpu.core_type<tc>, window_params = [{transform_indices = @transform_0, window_bounds = array<i64: 504, 128>}, {pipeline_mode = #tpu.pipeline_mode<synchronous>, transform_indices = @transform_1, window_bounds = array<i64: 128, 128>}, {pipeline_mode = #tpu.pipeline_mode<synchronous>, transform_indices = @transform_2, window_bounds = array<i64: 128, 128>}, {pipeline_mode = #tpu.pipeline_mode<synchronous>, transform_indices = @transform_3, window_bounds = array<i64: 2, 128>}, {transform_indices = @transform_4, window_bounds = array<i64: 504, 128>}]} {
    %c0 = arith.constant 0 : index
    %c0_0 = arith.constant 0 : index
    %0 = vector.load %arg1[%c0, %c0_0] : memref<504x128xf32, #tpu.memory_space<vmem>>, vector<504x128xf32>
    %c0_1 = arith.constant 0 : index
    %c0_2 = arith.constant 0 : index
    %1 = vector.load %arg4[%c0_1, %c0_2] : memref<2x128xf32, #tpu.memory_space<vmem>>, vector<1x128xf32>
    %c1 = arith.constant 1 : index
    %c0_3 = arith.constant 0 : index
    %2 = vector.load %arg4[%c1, %c0_3] : memref<2x128xf32, #tpu.memory_space<vmem>>, vector<1x128xf32>
    %3 = arith.truncf %0 : vector<504x128xf32> to vector<504x128xbf16>
    %c0_4 = arith.constant 0 : index
    %c0_5 = arith.constant 0 : index
    %4 = vector.load %arg2[%c0_4, %c0_5] : memref<128x128xbf16, #tpu.memory_space<vmem>>, vector<128x128xbf16>
    %cst = arith.constant dense<0.000000e+00> : vector<504x128xf32>
    %5 = tpu.matmul %3, %4, %cst {dimension_numbers = #tpu.dot_dimension_numbers<[1], [0], [0], [1], [0, 0, 1, 1], [], []>} : vector<504x128xbf16>, vector<128x128xbf16>, vector<504x128xf32> -> vector<504x128xf32>
    %6 = vector.broadcast %1 : vector<1x128xf32> to vector<504x128xf32>
    %7 = arith.addf %5, %6 : vector<504x128xf32>
    %cst_6 = arith.constant 5.000000e-01 : f32
    %8 = vector.broadcast %cst_6 : f32 to vector<504x128xf32>
    %9 = arith.mulf %8, %7 : vector<504x128xf32>
    %10 = math.tanh %9 : vector<504x128xf32>
    %cst_7 = arith.constant 5.000000e-01 : f32
    %11 = vector.broadcast %cst_7 : f32 to vector<504x128xf32>
    %12 = arith.mulf %11, %10 : vector<504x128xf32>
    %cst_8 = arith.constant 5.000000e-01 : f32
    %13 = vector.broadcast %cst_8 : f32 to vector<504x128xf32>
    %14 = arith.addf %12, %13 : vector<504x128xf32>
    %15 = arith.mulf %7, %14 : vector<504x128xf32>
    %16 = arith.truncf %15 : vector<504x128xf32> to vector<504x128xbf16>
    %c0_9 = arith.constant 0 : index
    %c0_10 = arith.constant 0 : index
    %17 = vector.load %arg3[%c0_9, %c0_10] : memref<128x128xbf16, #tpu.memory_space<vmem>>, vector<128x128xbf16>
    %cst_11 = arith.constant dense<0.000000e+00> : vector<504x128xf32>
    %18 = tpu.matmul %16, %17, %cst_11 {dimension_numbers = #tpu.dot_dimension_numbers<[1], [0], [0], [1], [0, 0, 1, 1], [], []>} : vector<504x128xbf16>, vector<128x128xbf16>, vector<504x128xf32> -> vector<504x128xf32>
    %19 = vector.broadcast %2 : vector<1x128xf32> to vector<504x128xf32>
    %20 = arith.addf %18, %19 : vector<504x128xf32>
    %cst_12 = arith.constant 5.000000e-01 : f32
    %21 = vector.broadcast %cst_12 : f32 to vector<504x128xf32>
    %22 = arith.mulf %21, %20 : vector<504x128xf32>
    %23 = math.tanh %22 : vector<504x128xf32>
    %cst_13 = arith.constant 5.000000e-01 : f32
    %24 = vector.broadcast %cst_13 : f32 to vector<504x128xf32>
    %25 = arith.mulf %24, %23 : vector<504x128xf32>
    %cst_14 = arith.constant 5.000000e-01 : f32
    %26 = vector.broadcast %cst_14 : f32 to vector<504x128xf32>
    %27 = arith.addf %25, %26 : vector<504x128xf32>
    %28 = arith.mulf %20, %27 : vector<504x128xf32>
    %29 = arith.addf %0, %28 : vector<504x128xf32>
    %c0_15 = arith.constant 0 : index
    %c0_16 = arith.constant 0 : index
    %30 = vector.load %arg5[%c0_15, %c0_16] : memref<504x128xf32, #tpu.memory_space<vmem>>, vector<504x128xf32>
    tpu.vector_store %arg5[%c0_15, %c0_16], %29 {strides = array<i32>} : memref<504x128xf32, #tpu.memory_space<vmem>>, vector<504x128xf32>,
    return
  }
  func.func @transform_0(%arg0: i32) -> (i32, i32) {
    %c0_i32 = arith.constant 0 : i32
    %c0_i32_0 = arith.constant 0 : i32
    return %arg0, %c0_i32 : i32, i32
  }
  func.func @transform_1(%arg0: i32) -> (i32, i32) {
    %c0_i32 = arith.constant 0 : i32
    %c0_i32_0 = arith.constant 0 : i32
    %c0_i32_1 = arith.constant 0 : i32
    return %c0_i32, %c0_i32_0 : i32, i32
  }
  func.func @transform_2(%arg0: i32) -> (i32, i32) {
    %c0_i32 = arith.constant 0 : i32
    %c0_i32_0 = arith.constant 0 : i32
    %c0_i32_1 = arith.constant 0 : i32
    return %c0_i32, %c0_i32_0 : i32, i32
  }
  func.func @transform_3(%arg0: i32) -> (i32, i32) {
    %c0_i32 = arith.constant 0 : i32
    %c0_i32_0 = arith.constant 0 : i32
    %c0_i32_1 = arith.constant 0 : i32
    return %c0_i32, %c0_i32_0 : i32, i32
  }
  func.func @transform_4(%arg0: i32) -> (i32, i32) {
    %c0_i32 = arith.constant 0 : i32
    %c0_i32_0 = arith.constant 0 : i32
    return %arg0, %c0_i32 : i32, i32
  }
}

</mosaic_0001>

<llo_original>
// kernel: tpu_custom_call.1
$region0: #{tpu_custom_call.1}
  #allocation0 [shape = 'u32[]', space=smem, size = 0x4, offset = 0x4, fixed_abs, tag = 'smem constant byte address 0x4 - core index']
  #allocation1 [shape = 'u32[144,128]{1,0:T(1,128)}', space=vmem, size = 0x12000, scoped, tag = 'internal scratch']
  %s0 = inlined_call_operand.hbm [shape: f32[1008,128], index: 0, kind: input, shape index: {}]
  %s1 = inlined_call_operand.hbm [shape: bf16[128,128], index: 1, kind: input, shape index: {}]
  %s2 = inlined_call_operand.hbm [shape: bf16[128,128], index: 2, kind: input, shape index: {}]
  %s3 = inlined_call_operand.vmem [shape: f32[2,128], index: 3, kind: input, shape index: {}]
  %s4 = inlined_call_operand.hbm [shape: f32[1008,128], index: 4, kind: output, shape index: {}]
  %s5 = sld [smem:[#allocation0]]
  $region61: #{tpu_custom_call.1} parent=0
    _
  %s7 = ssub.s32 1, %s5
  %s8 = scalar_select 0, %s7, %s5
  $region1: #{tpu_custom_call.1} parent=0
    #allocation2 [shape = 'u8[516096]{0}', space=vmem, size = 0x7e000, scoped, tag = 'input window, operand 0']
    #allocation3 [shape = 's32[2]{0}', space=sflag, size = 0x8, scoped, tag = 'scoped memory for tpu_custom_call.1']
    #allocation4 [shape = 's32[2]{0}', space=sflag, size = 0x8, scoped, tag = 'scoped memory for tpu_custom_call.1']
    #allocation5 [shape = 'u8[32768]{0}', space=vmem, size = 0x8000, scoped, tag = 'input window, operand 1, single buffered']
    #allocation6 [shape = 's32[1]{0}', space=sflag, size = 0x4, scoped, tag = 'scoped memory for tpu_custom_call.1']
    #allocation7 [shape = 'u8[32768]{0}', space=vmem, size = 0x8000, scoped, tag = 'input window, operand 2, single buffered']
    #allocation8 [shape = 'u8[516096]{0}', space=vmem, size = 0x7e000, scoped, tag = 'output window, operand 0']
    %9 = vsyncpa [#allocation3], 0
    %s10 = scalar_lea.sflag [#allocation3], 1
    %11 = vsyncpa %s10, 0
    %12 = vsyncpa [#allocation6], 0
    %13 = vsyncpa [#allocation4], 0
    %s14 = scalar_lea.sflag [#allocation4], 1
    %15 = vsyncpa %s14, 0
    loop: start=0, step=1, limit=4
    $region2: #{tpu_custom_call.1} parent=1 // loop_pre_header
      _
    $region3: #{tpu_custom_call.1} parent=1 // loop_header
      %s17 = sphi 0, %s21
      %p18 = scmp.ge.s32.totalorder %s17, 4
      %s27 = sphi 0, %s29
      %s30 = sphi 0, %s27
      %s31 = sphi 0, %s30
      %s47 = sphi 0, %s31
      %s51 = sphi 0, %s51
      %s53 = sphi 0, %s51
      %s54 = sphi 0, %s53
      %s68 = sphi 0, %s54
      %s72 = sphi 0, %s72
      %s74 = sphi 0, %s72
      %s75 = sphi 0, %s74
      %s89 = sphi 0, %s75
      %s93 = sphi 0, %s93
      %s95 = sphi 0, %s93
      %s96 = sphi 0, %s95
      %s110 = sphi 0, %s96
      %s116 = sphi 0, %s118
      %s119 = sphi 0, %s116
      %s120 = sphi 0, %s119
      %s136 = sphi 0, %s120
    $region4: #{tpu_custom_call.1} parent=1 // loop_header_branch
      %20 = sbr.rel (%p18) target = $region8
    $region5: #{tpu_custom_call.1} parent=1 // loop_body
      %s22 = ssub.s32 %s17, 1
      %s23 = ssub.s32 %s17, 2
      %s24 = sadd.s32 %s17, 1
      %s25 = ssub.s32 %s17, %s24
      %p26 = scmp.eq.s32.totalorder %s25, 0
      %s28 = sadd.s32 %s27, 1
      %s29 = scalar_select %p26, %s27, %s28
      %p32 = pneg %p26
      %p33 = scmp.eq.s32.totalorder %s17, 1
      %p34 = por %p32, %p33
      %p35 = scmp.ne.s32.totalorder %s27, %s30
      %p36 = scmp.eq.s32.totalorder %s17, 0
      %p37 = por %p35, %p36
      %p38 = scmp.ne.s32.totalorder %s27, %s30
      %p39 = scmp.eq.s32.totalorder %s22, 1
      %p40 = por %p38, %p39
      %p41 = scmp.ne.s32.totalorder %s30, %s31
      %p42 = scmp.eq.s32.totalorder %s22, 0
      %p43 = por %p41, %p42
      %p44 = scmp.ne.s32.totalorder %s30, %s31
      %p45 = scmp.eq.s32.totalorder %s23, 1
      %p46 = por %p44, %p45
      %p48 = scmp.ne.s32.totalorder %s31, %s47
      %p49 = scmp.eq.s32.totalorder %s23, 0
      %p50 = por %p48, %p49
      %s52 = sadd.s32 %s51, 1
      %p55 = scmp.eq.s32.totalorder %s17, 1
      %p56 = scmp.ne.s32.totalorder %s51, %s53
      %p57 = scmp.eq.s32.totalorder %s17, 0
      %p58 = por %p56, %p57
      %p59 = scmp.ne.s32.totalorder %s51, %s53
      %p60 = scmp.eq.s32.totalorder %s22, 1
      %p61 = por %p59, %p60
      %p62 = scmp.ne.s32.totalorder %s53, %s54
      %p63 = scmp.eq.s32.totalorder %s22, 0
      %p64 = por %p62, %p63
      %p65 = scmp.ne.s32.totalorder %s53, %s54
      %p66 = scmp.eq.s32.totalorder %s23, 1
      %p67 = por %p65, %p66
      %p69 = scmp.ne.s32.totalorder %s54, %s68
      %p70 = scmp.eq.s32.totalorder %s23, 0
      %p71 = por %p69, %p70
      %s73 = sadd.s32 %s72, 1
      %p76 = scmp.eq.s32.totalorder %s17, 1
      %p77 = scmp.ne.s32.totalorder %s72, %s74
      %p78 = scmp.eq.s32.totalorder %s17, 0
      %p79 = por %p77, %p78
      %p80 = scmp.ne.s32.totalorder %s72, %s74
      %p81 = scmp.eq.s32.totalorder %s22, 1
      %p82 = por %p80, %p81
      %p83 = scmp.ne.s32.totalorder %s74, %s75
      %p84 = scmp.eq.s32.totalorder %s22, 0
      %p85 = por %p83, %p84
      %p86 = scmp.ne.s32.totalorder %s74, %s75
      %p87 = scmp.eq.s32.totalorder %s23, 1
      %p88 = por %p86, %p87
      %p90 = scmp.ne.s32.totalorder %s75, %s89
      %p91 = scmp.eq.s32.totalorder %s23, 0
      %p92 = por %p90, %p91
      %s94 = sadd.s32 %s93, 1
      %p97 = scmp.eq.s32.totalorder %s17, 1
      %p98 = scmp.ne.s32.totalorder %s93, %s95
      %p99 = scmp.eq.s32.totalorder %s17, 0
      %p100 = por %p98, %p99
      %p101 = scmp.ne.s32.totalorder %s93, %s95
      %p102 = scmp.eq.s32.totalorder %s22, 1
      %p103 = por %p101, %p102
      %p104 = scmp.ne.s32.totalorder %s95, %s96
      %p105 = scmp.eq.s32.totalorder %s22, 0
      %p106 = por %p104, %p105
      %p107 = scmp.ne.s32.totalorder %s95, %s96
      %p108 = scmp.eq.s32.totalorder %s23, 1
      %p109 = por %p107, %p108
      %p111 = scmp.ne.s32.totalorder %s96, %s110
      %p112 = scmp.eq.s32.totalorder %s23, 0
      %p113 = por %p111, %p112
      %s114 = ssub.s32 %s17, %s24
      %p115 = scmp.eq.s32.totalorder %s114, 0
      %s117 = sadd.s32 %s116, 1
      %s118 = scalar_select %p115, %s116, %s117
      %p121 = pneg %p115
      %p122 = scmp.eq.s32.totalorder %s17, 1
      %p123 = por %p121, %p122
      %p124 = scmp.ne.s32.totalorder %s116, %s119
      %p125 = scmp.eq.s32.totalorder %s17, 0
      %p126 = por %p124, %p125
      %p127 = scmp.ne.s32.totalorder %s116, %s119
      %p128 = scmp.eq.s32.totalorder %s22, 1
      %p129 = por %p127, %p128
      %p130 = scmp.ne.s32.totalorder %s119, %s120
      %p131 = scmp.eq.s32.totalorder %s22, 0
      %p132 = por %p130, %p131
      %p133 = scmp.ne.s32.totalorder %s119, %s120
      %p134 = scmp.eq.s32.totalorder %s23, 1
      %p135 = por %p133, %p134
      %p137 = scmp.ne.s32.totalorder %s120, %s136
      %p138 = scmp.eq.s32.totalorder %s23, 0
      %p139 = por %p137, %p138
      %p140 = scmp.le.s32.totalorder 1, %s17
      %p141 = scmp.lt.s32.totalorder %s17, 3
      %p142 = pnand %p140, %p141
      %p143 = pneg %p142
      // Predicated region
      $region9: #{tpu_custom_call.1} parent=5 // pred_check
        _
      $region10: #{tpu_custom_call.1} parent=5 // pred_check_branch
        %145 = sbr.rel (%p142) target = $region12
      $region11: #{tpu_custom_call.1} parent=5 // pred_region
        %s146 = ssub.s32 %s17, 1
        // Predicated region
        $region13: #{tpu_custom_call.1} parent=11 // pred_check
          %p147 = pneg %p64
        $region14: #{tpu_custom_call.1} parent=11 // pred_check_branch
          %149 = sbr.rel (%p147) target = $region16
        $region15: #{tpu_custom_call.1} parent=11 // pred_region
          %s151 = ssub.s32 1024, 1024
          %152 = vsyncadd [#allocation6], %s151
          %s153 = sshll.u32 [#allocation5], 4
          %s154 = int_to_ptr.vmem [resolvable:$true] %s153
          %159 = dma.hbm_to_vmem [thread:$0]  %s1, 1024, %s154, [#allocation6], 64, 64, 4
        $region16: #{tpu_custom_call.1} parent=11 // pred_fallthru
          _
        // Predicated region
        $region17: #{tpu_custom_call.1} parent=11 // pred_check
          %p160 = pneg %p85
        $region18: #{tpu_custom_call.1} parent=11 // pred_check_branch
          %162 = sbr.rel (%p160) target = $region20
        $region19: #{tpu_custom_call.1} parent=11 // pred_region
          %s164 = ssub.s32 1024, 1024
          %165 = vsyncadd [#allocation6], %s164
          %s166 = sshll.u32 [#allocation7], 4
          %s167 = int_to_ptr.vmem [resolvable:$true] %s166
          %172 = dma.hbm_to_vmem [thread:$0]  %s2, 1024, %s167, [#allocation6], 64, 64, 4
        $region20: #{tpu_custom_call.1} parent=11 // pred_fallthru
          _
        // Predicated region
        $region21: #{tpu_custom_call.1} parent=11 // pred_check
          %p173 = pneg %p106
        $region22: #{tpu_custom_call.1} parent=11 // pred_check_branch
          %175 = sbr.rel (%p173) target = $region24
        $region23: #{tpu_custom_call.1} parent=11 // pred_region
          _
        $region24: #{tpu_custom_call.1} parent=11 // pred_fallthru
          _
      $region12: #{tpu_custom_call.1} parent=5 // pred_fallthru
        _
      %p176 = scmp.lt.s32.totalorder %s17, 2
      // Predicated region
      $region25: #{tpu_custom_call.1} parent=5 // pred_check
        %p177 = pneg %p176
      $region26: #{tpu_custom_call.1} parent=5 // pred_check_branch
        %179 = sbr.rel (%p177) target = $region28
      $region27: #{tpu_custom_call.1} parent=5 // pred_region
        // Predicated region
        $region29: #{tpu_custom_call.1} parent=27 // pred_check
          %p180 = pneg %p37
        $region30: #{tpu_custom_call.1} parent=27 // pred_check_branch
          %182 = sbr.rel (%p180) target = $region32
        $region31: #{tpu_custom_call.1} parent=27 // pred_region
          %s183 = sand.u32 %s27, 1
          %s184 = scalar_lea.sflag [#allocation3], %s183
          %s185 = sand.u32 %s27, 1
          %s186 = smul.addr %s185, 504
          %s187 = scalar_lea.vmem [#allocation2], %s186
          %s188 = smul.u32 63, %s17
          %s190 = ssub.s32 8064, 8064
          %191 = vsyncadd %s184, %s190
          %s192 = smul.addr %s188, 128
          %s193 = scalar_lea.hbm %s0, %s192
          %s194 = sshll.u32 %s187, 4
          %s195 = int_to_ptr.vmem [resolvable:$true] %s194
          %200 = dma.hbm_to_vmem [thread:$0]  %s193, 8064, %s195, %s184, 128, 128, 8
        $region32: #{tpu_custom_call.1} parent=27 // pred_fallthru
          _
      $region28: #{tpu_custom_call.1} parent=5 // pred_fallthru
        _
      %p201 = scmp.le.s32.totalorder 1, %s17
      %p202 = scmp.lt.s32.totalorder %s17, 3
      %p203 = pnand %p201, %p202
      %p204 = pneg %p203
      // Predicated region
      $region33: #{tpu_custom_call.1} parent=5 // pred_check
        _
      $region34: #{tpu_custom_call.1} parent=5 // pred_check_branch
        %206 = sbr.rel (%p203) target = $region36
      $region35: #{tpu_custom_call.1} parent=5 // pred_region
        %s207 = ssub.s32 %s17, 1
        %s208 = sand.u32 %s30, 1
        %s209 = scalar_lea.sflag [#allocation3], %s208
        %s210 = sand.u32 %s30, 1
        %s211 = smul.addr %s210, 504
        %s212 = scalar_lea.vmem [#allocation2], %s211
        // Predicated region
        $region37: #{tpu_custom_call.1} parent=35 // pred_check
          %p213 = pneg %p43
        $region38: #{tpu_custom_call.1} parent=35 // pred_check_branch
          %215 = sbr.rel (%p213) target = $region40
        $region39: #{tpu_custom_call.1} parent=35 // pred_region
          %216 = dma.done %s209, 8064
        $region40: #{tpu_custom_call.1} parent=35 // pred_fallthru
          _
        // Predicated region
        $region41: #{tpu_custom_call.1} parent=35 // pred_check
          %p217 = pneg %p64
        $region42: #{tpu_custom_call.1} parent=35 // pred_check_branch
          %219 = sbr.rel (%p217) target = $region44
        $region43: #{tpu_custom_call.1} parent=35 // pred_region
          %220 = dma.done [#allocation6], 1024
        $region44: #{tpu_custom_call.1} parent=35 // pred_fallthru
          _
        // Predicated region
        $region45: #{tpu_custom_call.1} parent=35 // pred_check
          %p221 = pneg %p85
        $region46: #{tpu_custom_call.1} parent=35 // pred_check_branch
          %223 = sbr.rel (%p221) target = $region48
        $region47: #{tpu_custom_call.1} parent=35 // pred_region
          %224 = dma.done [#allocation6], 1024
        $region48: #{tpu_custom_call.1} parent=35 // pred_fallthru
          _
        %s225 = sand.u32 %s30, 1
        %s226 = scalar_lea.sflag [#allocation3], %s225
        %s227 = sand.u32 %s30, 1
        %s228 = smul.addr %s227, 504
        %s229 = scalar_lea.vmem [#allocation2], %s228
        %p230 = pneg %p43
        %p231 = pneg %p40
        %p232 = pneg %p64
        %p233 = pneg %p61
        %p234 = pneg %p85
        %p235 = pneg %p82
        %p236 = pneg %p106
        %p237 = pneg %p103
        %p238 = pneg %p132
        %p239 = pneg %p129
        %s240 = sand.u32 %s119, 1
        %s241 = scalar_lea.sflag [#allocation4], %s240
        %s242 = sand.u32 %s119, 1
        %s243 = smul.addr %s242, 504
        %s244 = scalar_lea.vmem [#allocation8], %s243
        %s245 = smul.u32 63, %s22
        %s246 = smul.u32 63, %s22
        %v248 = vld [vmem:[%s212] sm:$0xff]
        %v249 = vld [vmem:[%s212 + $0x8] sm:$0xff]
        %v250 = vld [vmem:[%s212 + $0x10] sm:$0xff]
        %v251 = vld [vmem:[%s212 + $0x18] sm:$0xff]
        %v252 = vld [vmem:[%s212 + $0x20] sm:$0xff]
        %v253 = vld [vmem:[%s212 + $0x28] sm:$0xff]
        %v254 = vld [vmem:[%s212 + $0x30] sm:$0xff]
        %v255 = vld [vmem:[%s212 + $0x38] sm:$0xff]
        %v256 = vld [vmem:[%s212 + $0x40] sm:$0xff]
        %v257 = vld [vmem:[%s212 + $0x48] sm:$0xff]
        %v258 = vld [vmem:[%s212 + $0x50] sm:$0xff]
        %v259 = vld [vmem:[%s212 + $0x58] sm:$0xff]
        %v260 = vld [vmem:[%s212 + $0x60] sm:$0xff]
        %v261 = vld [vmem:[%s212 + $0x68] sm:$0xff]
        %v262 = vld [vmem:[%s212 + $0x70] sm:$0xff]
        %v263 = vld [vmem:[%s212 + $0x78] sm:$0xff]
        %v264 = vld [vmem:[%s212 + $0x80] sm:$0xff]
        %v265 = vld [vmem:[%s212 + $0x88] sm:$0xff]
        %v266 = vld [vmem:[%s212 + $0x90] sm:$0xff]
        %v267 = vld [vmem:[%s212 + $0x98] sm:$0xff]
        %v268 = vld [vmem:[%s212 + $0xa0] sm:$0xff]
        %v269 = vld [vmem:[%s212 + $0xa8] sm:$0xff]
        %v270 = vld [vmem:[%s212 + $0xb0] sm:$0xff]
        %v271 = vld [vmem:[%s212 + $0xb8] sm:$0xff]
        %v272 = vld [vmem:[%s212 + $0xc0] sm:$0xff]
        %v273 = vld [vmem:[%s212 + $0xc8] sm:$0xff]
        %v274 = vld [vmem:[%s212 + $0xd0] sm:$0xff]
        %v275 = vld [vmem:[%s212 + $0xd8] sm:$0xff]
        %v276 = vld [vmem:[%s212 + $0xe0] sm:$0xff]
        %v277 = vld [vmem:[%s212 + $0xe8] sm:$0xff]
        %v278 = vld [vmem:[%s212 + $0xf0] sm:$0xff]
        %v279 = vld [vmem:[%s212 + $0xf8] sm:$0xff]
        %v280 = vld [vmem:[%s212 + $0x100] sm:$0xff]
        %v281 = vld [vmem:[%s212 + $0x108] sm:$0xff]
        %v282 = vld [vmem:[%s212 + $0x110] sm:$0xff]
        %v283 = vld [vmem:[%s212 + $0x118] sm:$0xff]
        %v284 = vld [vmem:[%s212 + $0x120] sm:$0xff]
        %v285 = vld [vmem:[%s212 + $0x128] sm:$0xff]
        %v286 = vld [vmem:[%s212 + $0x130] sm:$0xff]
        %v287 = vld [vmem:[%s212 + $0x138] sm:$0xff]
        %v288 = vld [vmem:[%s212 + $0x140] sm:$0xff]
        %v289 = vld [vmem:[%s212 + $0x148] sm:$0xff]
        %v290 = vld [vmem:[%s212 + $0x150] sm:$0xff]
        %v291 = vld [vmem:[%s212 + $0x158] sm:$0xff]
        %v292 = vld [vmem:[%s212 + $0x160] sm:$0xff]
        %v293 = vld [vmem:[%s212 + $0x168] sm:$0xff]
        %v294 = vld [vmem:[%s212 + $0x170] sm:$0xff]
        %v295 = vld [vmem:[%s212 + $0x178] sm:$0xff]
        %v296 = vld [vmem:[%s212 + $0x180] sm:$0xff]
        %v297 = vld [vmem:[%s212 + $0x188] sm:$0xff]
        %v298 = vld [vmem:[%s212 + $0x190] sm:$0xff]
        %v299 = vld [vmem:[%s212 + $0x198] sm:$0xff]
        %v300 = vld [vmem:[%s212 + $0x1a0] sm:$0xff]
        %v301 = vld [vmem:[%s212 + $0x1a8] sm:$0xff]
        %v302 = vld [vmem:[%s212 + $0x1b0] sm:$0xff]
        %v303 = vld [vmem:[%s212 + $0x1b8] sm:$0xff]
        %v304 = vld [vmem:[%s212 + $0x1c0] sm:$0xff]
        %v305 = vld [vmem:[%s212 + $0x1c8] sm:$0xff]
        %v306 = vld [vmem:[%s212 + $0x1d0] sm:$0xff]
        %v307 = vld [vmem:[%s212 + $0x1d8] sm:$0xff]
        %v308 = vld [vmem:[%s212 + $0x1e0] sm:$0xff]
        %v309 = vld [vmem:[%s212 + $0x1e8] sm:$0xff]
        %v310 = vld [vmem:[%s212 + $0x1f0] sm:$0xff]
        %v311 = vld [vmem:[%s3] sm:$0x1]
        %v312 = vld [vmem:[%s3 + $0x1] sm:$0x1]
        %v313 = vpack.c.bf16 %v249, %v248
        %v314 = vpack.c.bf16 %v251, %v250
        %v315 = vpack.c.bf16 %v253, %v252
        %v316 = vpack.c.bf16 %v255, %v254
        %v317 = vpack.c.bf16 %v257, %v256
        %v318 = vpack.c.bf16 %v259, %v258
        %v319 = vpack.c.bf16 %v261, %v260
        %v320 = vpack.c.bf16 %v263, %v262
        %v321 = vpack.c.bf16 %v265, %v264
        %v322 = vpack.c.bf16 %v267, %v266
        %v323 = vpack.c.bf16 %v269, %v268
        %v324 = vpack.c.bf16 %v271, %v270
        %v325 = vpack.c.bf16 %v273, %v272
        %v326 = vpack.c.bf16 %v275, %v274
        %v327 = vpack.c.bf16 %v277, %v276
        %v328 = vpack.c.bf16 %v279, %v278
        %v329 = vpack.c.bf16 %v281, %v280
        %v330 = vpack.c.bf16 %v283, %v282
        %v331 = vpack.c.bf16 %v285, %v284
        %v332 = vpack.c.bf16 %v287, %v286
        %v333 = vpack.c.bf16 %v289, %v288
        %v334 = vpack.c.bf16 %v291, %v290
        %v335 = vpack.c.bf16 %v293, %v292
        %v336 = vpack.c.bf16 %v295, %v294
        %v337 = vpack.c.bf16 %v297, %v296
        %v338 = vpack.c.bf16 %v299, %v298
        %v339 = vpack.c.bf16 %v301, %v300
        %v340 = vpack.c.bf16 %v303, %v302
        %v341 = vpack.c.bf16 %v305, %v304
        %v342 = vpack.c.bf16 %v307, %v306
        %v343 = vpack.c.bf16 %v309, %v308
        %v344 = vpack.c.bf16 %v310, %v310
        %v345 = vld [vmem:[#allocation5] sm:$0xf]
        %v346 = vld [vmem:[#allocation5 + $0x4] sm:$0xf]
        %v347 = vld [vmem:[#allocation5 + $0x8] sm:$0xf]
        %v348 = vld [vmem:[#allocation5 + $0xc] sm:$0xf]
        %v349 = vld [vmem:[#allocation5 + $0x10] sm:$0xf]
        %v350 = vld [vmem:[#allocation5 + $0x14] sm:$0xf]
        %v351 = vld [vmem:[#allocation5 + $0x18] sm:$0xf]
        %v352 = vld [vmem:[#allocation5 + $0x1c] sm:$0xf]
        %v353 = vld [vmem:[#allocation5 + $0x20] sm:$0xf]
        %v354 = vld [vmem:[#allocation5 + $0x24] sm:$0xf]
        %v355 = vld [vmem:[#allocation5 + $0x28] sm:$0xf]
        %v356 = vld [vmem:[#allocation5 + $0x2c] sm:$0xf]
        %v357 = vld [vmem:[#allocation5 + $0x30] sm:$0xf]
        %v358 = vld [vmem:[#allocation5 + $0x34] sm:$0xf]
        %v359 = vld [vmem:[#allocation5 + $0x38] sm:$0xf]
        %v360 = vld [vmem:[#allocation5 + $0x3c] sm:$0xf]
        %v361 = vlaneseq
        %v362 = vshrl.u32 %v361, 7
        %v363 = vsub.s32 0, %v362
        %v364 = vrot.slane %v311, %v363
        %v381 = vunpack.c.l.b16 %v345
        %v382 = vunpack.c.l.b16 %v346
        %v383 = vunpack.c.l.b16 %v347
        %v384 = vunpack.c.l.b16 %v348
        %v385 = vunpack.c.l.b16 %v349
        %v386 = vunpack.c.l.b16 %v350
        %v387 = vunpack.c.l.b16 %v351
        %v388 = vunpack.c.l.b16 %v352
        %v389 = vunpack.c.l.b16 %v353
        %v390 = vunpack.c.l.b16 %v354
        %v391 = vunpack.c.l.b16 %v355
        %v392 = vunpack.c.l.b16 %v356
        %v393 = vunpack.c.l.b16 %v357
        %v394 = vunpack.c.l.b16 %v358
        %v395 = vunpack.c.l.b16 %v359
        %v396 = vunpack.c.l.b16 %v360
        %v397 = vpack.c.b16 %v382, %v381
        %v398 = vpack.c.b16 %v384, %v383
        %v399 = vpack.c.b16 %v386, %v385
        %v400 = vpack.c.b16 %v388, %v387
        %v401 = vpack.c.b16 %v390, %v389
        %v402 = vpack.c.b16 %v392, %v391
        %v403 = vpack.c.b16 %v394, %v393
        %v404 = vpack.c.b16 %v396, %v395
        %413 = vmatprep.subr.bf16.mxu0 0
        %414 = vmatpush1.bf16.msra.mxu0 %v397
        %415 = vmatprep.subr.bf16.mxu0 0
        %416 = vmatpush1.bf16.msra.mxu0 %v398
        %417 = vmatprep.subr.bf16.mxu0 0
        %418 = vmatpush1.bf16.msra.mxu0 %v399
        %419 = vmatprep.subr.bf16.mxu0 0
        %420 = vmatpush1.bf16.msra.mxu0 %v400
        %421 = vmatprep.subr.bf16.mxu0 0
        %422 = vmatpush1.bf16.msra.mxu0 %v401
        %423 = vmatprep.subr.bf16.mxu0 0
        %424 = vmatpush1.bf16.msra.mxu0 %v402
        %425 = vmatprep.subr.bf16.mxu0 0
        %426 = vmatpush1.bf16.msra.mxu0 %v403
        %427 = vmatprep.subr.bf16.mxu0 0
        %428 = vmatpush1.bf16.msra.mxu0 %v404
        %429 = vmatprep.subr.bf16.mxu0 0
        %430 = vmatpush1.bf16.msra.mxu0 0
        %431 = vmatprep.subr.bf16.mxu0 0
        %432 = vmatpush1.bf16.msra.mxu0 0
        %433 = vmatprep.subr.bf16.mxu0 0
        %434 = vmatpush1.bf16.msra.mxu0 0
        %435 = vmatprep.subr.bf16.mxu0 0
        %436 = vmatpush1.bf16.msra.mxu0 0
        %437 = vmatprep.subr.bf16.mxu0 0
        %438 = vmatpush1.bf16.msra.mxu0 0
        %439 = vmatprep.subr.bf16.mxu0 0
        %440 = vmatpush1.bf16.msra.mxu0 0
        %441 = vmatprep.subr.bf16.mxu0 0
        %442 = vmatpush1.bf16.msra.mxu0 0
        %443 = vmatprep.subr.bf16.mxu0 0
        %444 = vmatpush1.bf16.msra.mxu0 0
        %445 = vmatprep.mubr.bf16.mxu0 0
        %446 = vmatmul.mubr.bf16.gmra.mrb[0].mxu0 %v313
        %v447 = vpop.f32.mrb[0].mxu0
        %v448 = vadd.f32 %v364, %v447
        %v449 = vpop.f32.mrb[0].mxu0
        %v450 = vpop.f32.mrb[0].mxu0
        %v451 = vadd.f32 %v364, %v450
        %v452 = vpop.f32.mrb[0].mxu0
        %453 = vmatprep.mubr.bf16.mxu0 0
        %454 = vmatmul.mubr.bf16.gmra.mrb[0].mxu0 %v314
        %v455 = vpop.f32.mrb[0].mxu0
        %v456 = vadd.f32 %v364, %v455
        %v457 = vpop.f32.mrb[0].mxu0
        %v458 = vpop.f32.mrb[0].mxu0
        %v459 = vadd.f32 %v364, %v458
        %v460 = vpop.f32.mrb[0].mxu0
        %461 = vmatprep.mubr.bf16.mxu0 0
        %462 = vmatmul.mubr.bf16.gmra.mrb[0].mxu0 %v315
        %v463 = vpop.f32.mrb[0].mxu0
        %v464 = vadd.f32 %v364, %v463
        %v465 = vpop.f32.mrb[0].mxu0
        %v466 = vpop.f32.mrb[0].mxu0
        %v467 = vadd.f32 %v364, %v466
        %v468 = vpop.f32.mrb[0].mxu0
        %469 = vmatprep.mubr.bf16.mxu0 0
        %470 = vmatmul.mubr.bf16.gmra.mrb[0].mxu0 %v316
        %v471 = vpop.f32.mrb[0].mxu0
        %v472 = vadd.f32 %v364, %v471
        %v473 = vpop.f32.mrb[0].mxu0
        %v474 = vpop.f32.mrb[0].mxu0
        %v475 = vadd.f32 %v364, %v474
        %v476 = vpop.f32.mrb[0].mxu0
        %477 = vmatprep.mubr.bf16.mxu0 0
        %478 = vmatmul.mubr.bf16.gmra.mrb[0].mxu0 %v317
        %v479 = vpop.f32.mrb[0].mxu0
        %v480 = vadd.f32 %v364, %v479
        %v481 = vpop.f32.mrb[0].mxu0
        %v482 = vpop.f32.mrb[0].mxu0
        %v483 = vadd.f32 %v364, %v482
        %v484 = vpop.f32.mrb[0].mxu0
        %485 = vmatprep.mubr.bf16.mxu0 0
        %486 = vmatmul.mubr.bf16.gmra.mrb[0].mxu0 %v318
        %v487 = vpop.f32.mrb[0].mxu0
        %v488 = vadd.f32 %v364, %v487
        %v489 = vpop.f32.mrb[0].mxu0
        %v490 = vpop.f32.mrb[0].mxu0
        %v491 = vadd.f32 %v364, %v490
        %v492 = vpop.f32.mrb[0].mxu0
        %493 = vmatprep.mubr.bf16.mxu0 0
        %494 = vmatmul.mubr.bf16.gmra.mrb[0].mxu0 %v319
        %v495 = vpop.f32.mrb[0].mxu0
        %v496 = vadd.f32 %v364, %v495
        %v497 = vpop.f32.mrb[0].mxu0
        %v498 = vpop.f32.mrb[0].mxu0
        %v499 = vadd.f32 %v364, %v498
        %v500 = vpop.f32.mrb[0].mxu0
        %501 = vmatprep.mubr.bf16.mxu0 0
        %502 = vmatmul.mubr.bf16.gmra.mrb[0].mxu0 %v320
        %v503 = vpop.f32.mrb[0].mxu0
        %v504 = vadd.f32 %v364, %v503
        %v505 = vpop.f32.mrb[0].mxu0
        %v506 = vpop.f32.mrb[0].mxu0
        %v507 = vadd.f32 %v364, %v506
        %v508 = vpop.f32.mrb[0].mxu0
        %509 = vmatprep.mubr.bf16.mxu0 0
        %510 = vmatmul.mubr.bf16.gmra.mrb[0].mxu0 %v321
        %v511 = vpop.f32.mrb[0].mxu0
        %v512 = vadd.f32 %v364, %v511
        %v513 = vpop.f32.mrb[0].mxu0
        %v514 = vpop.f32.mrb[0].mxu0
        %v515 = vadd.f32 %v364, %v514
        %v516 = vpop.f32.mrb[0].mxu0
        %517 = vmatprep.mubr.bf16.mxu0 0
        %518 = vmatmul.mubr.bf16.gmra.mrb[0].mxu0 %v322
        %v519 = vpop.f32.mrb[0].mxu0
        %v520 = vadd.f32 %v364, %v519
        %v521 = vpop.f32.mrb[0].mxu0
        %v522 = vpop.f32.mrb[0].mxu0
        %v523 = vadd.f32 %v364, %v522
        %v524 = vpop.f32.mrb[0].mxu0
        %525 = vmatprep.mubr.bf16.mxu0 0
        %526 = vmatmul.mubr.bf16.gmra.mrb[0].mxu0 %v323
        %v527 = vpop.f32.mrb[0].mxu0
        %v528 = vadd.f32 %v364, %v527
        %v529 = vpop.f32.mrb[0].mxu0
        %v530 = vpop.f32.mrb[0].mxu0
        %v531 = vadd.f32 %v364, %v530
        %v532 = vpop.f32.mrb[0].mxu0
        %533 = vmatprep.mubr.bf16.mxu0 0
        %534 = vmatmul.mubr.bf16.gmra.mrb[0].mxu0 %v324
        %v535 = vpop.f32.mrb[0].mxu0
        %v536 = vadd.f32 %v364, %v535
        %v537 = vpop.f32.mrb[0].mxu0
        %v538 = vpop.f32.mrb[0].mxu0
        %v539 = vadd.f32 %v364, %v538
        %v540 = vpop.f32.mrb[0].mxu0
        %541 = vmatprep.mubr.bf16.mxu0 0
        %542 = vmatmul.mubr.bf16.gmra.mrb[0].mxu0 %v325
        %v543 = vpop.f32.mrb[0].mxu0
        %v544 = vadd.f32 %v364, %v543
        %v545 = vpop.f32.mrb[0].mxu0
        %v546 = vpop.f32.mrb[0].mxu0
        %v547 = vadd.f32 %v364, %v546
        %v548 = vpop.f32.mrb[0].mxu0
        %549 = vmatprep.mubr.bf16.mxu0 0
        %550 = vmatmul.mubr.bf16.gmra.mrb[0].mxu0 %v326
        %v551 = vpop.f32.mrb[0].mxu0
        %v552 = vadd.f32 %v364, %v551
        %v553 = vpop.f32.mrb[0].mxu0
        %v554 = vpop.f32.mrb[0].mxu0
        %v555 = vadd.f32 %v364, %v554
        %v556 = vpop.f32.mrb[0].mxu0
        %557 = vmatprep.mubr.bf16.mxu0 0
        %558 = vmatmul.mubr.bf16.gmra.mrb[0].mxu0 %v327
        %v559 = vpop.f32.mrb[0].mxu0
        %v560 = vadd.f32 %v364, %v559
        %v561 = vpop.f32.mrb[0].mxu0
        %v562 = vpop.f32.mrb[0].mxu0
        %v563 = vadd.f32 %v364, %v562
        %v564 = vpop.f32.mrb[0].mxu0
        %565 = vmatprep.mubr.bf16.mxu0 0
        %566 = vmatmul.mubr.bf16.gmra.mrb[0].mxu0 %v328
        %v567 = vpop.f32.mrb[0].mxu0
        %v568 = vadd.f32 %v364, %v567
        %v569 = vpop.f32.mrb[0].mxu0
        %v570 = vpop.f32.mrb[0].mxu0
        %v571 = vadd.f32 %v364, %v570
        %v572 = vpop.f32.mrb[0].mxu0
        %573 = vmatprep.mubr.bf16.mxu0 0
        %574 = vmatmul.mubr.bf16.gmra.mrb[0].mxu0 %v329
        %v575 = vpop.f32.mrb[0].mxu0
        %v576 = vadd.f32 %v364, %v575
        %v577 = vpop.f32.mrb[0].mxu0
        %v578 = vpop.f32.mrb[0].mxu0
        %v579 = vadd.f32 %v364, %v578
        %v580 = vpop.f32.mrb[0].mxu0
        %581 = vmatprep.mubr.bf16.mxu0 0
        %582 = vmatmul.mubr.bf16.gmra.mrb[0].mxu0 %v330
        %v583 = vpop.f32.mrb[0].mxu0
        %v584 = vadd.f32 %v364, %v583
        %v585 = vpop.f32.mrb[0].mxu0
        %v586 = vpop.f32.mrb[0].mxu0
        %v587 = vadd.f32 %v364, %v586
        %v588 = vpop.f32.mrb[0].mxu0
        %589 = vmatprep.mubr.bf16.mxu0 0
        %590 = vmatmul.mubr.bf16.gmra.mrb[0].mxu0 %v331
        %v591 = vpop.f32.mrb[0].mxu0
        %v592 = vadd.f32 %v364, %v591
        %v593 = vpop.f32.mrb[0].mxu0
        %v594 = vpop.f32.mrb[0].mxu0
        %v595 = vadd.f32 %v364, %v594
        %v596 = vpop.f32.mrb[0].mxu0
        %597 = vmatprep.mubr.bf16.mxu0 0
        %598 = vmatmul.mubr.bf16.gmra.mrb[0].mxu0 %v332
        %v599 = vpop.f32.mrb[0].mxu0
        %v600 = vadd.f32 %v364, %v599
        %v601 = vpop.f32.mrb[0].mxu0
        %v602 = vpop.f32.mrb[0].mxu0
        %v603 = vadd.f32 %v364, %v602
        %v604 = vpop.f32.mrb[0].mxu0
        %605 = vmatprep.mubr.bf16.mxu0 0
        %606 = vmatmul.mubr.bf16.gmra.mrb[0].mxu0 %v333
        %v607 = vpop.f32.mrb[0].mxu0
        %v608 = vadd.f32 %v364, %v607
        %v609 = vpop.f32.mrb[0].mxu0
        %v610 = vpop.f32.mrb[0].mxu0
        %v611 = vadd.f32 %v364, %v610
        %v612 = vpop.f32.mrb[0].mxu0
        %613 = vmatprep.mubr.bf16.mxu0 0
        %614 = vmatmul.mubr.bf16.gmra.mrb[0].mxu0 %v334
        %v615 = vpop.f32.mrb[0].mxu0
        %v616 = vadd.f32 %v364, %v615
        %v617 = vpop.f32.mrb[0].mxu0
        %v618 = vpop.f32.mrb[0].mxu0
        %v619 = vadd.f32 %v364, %v618
        %v620 = vpop.f32.mrb[0].mxu0
        %621 = vmatprep.mubr.bf16.mxu0 0
        %622 = vmatmul.mubr.bf16.gmra.mrb[0].mxu0 %v335
        %v623 = vpop.f32.mrb[0].mxu0
        %v624 = vadd.f32 %v364, %v623
        %v625 = vpop.f32.mrb[0].mxu0
        %v626 = vpop.f32.mrb[0].mxu0
        %v627 = vadd.f32 %v364, %v626
        %v628 = vpop.f32.mrb[0].mxu0
        %629 = vmatprep.mubr.bf16.mxu0 0
        %630 = vmatmul.mubr.bf16.gmra.mrb[0].mxu0 %v336
        %v631 = vpop.f32.mrb[0].mxu0
        %v632 = vadd.f32 %v364, %v631
        %v633 = vpop.f32.mrb[0].mxu0
        %v634 = vpop.f32.mrb[0].mxu0
        %v635 = vadd.f32 %v364, %v634
        %v636 = vpop.f32.mrb[0].mxu0
        %637 = vmatprep.mubr.bf16.mxu0 0
        %638 = vmatmul.mubr.bf16.gmra.mrb[0].mxu0 %v337
        %v639 = vpop.f32.mrb[0].mxu0
        %v640 = vadd.f32 %v364, %v639
        %v641 = vpop.f32.mrb[0].mxu0
        %v642 = vpop.f32.mrb[0].mxu0
        %v643 = vadd.f32 %v364, %v642
        %v644 = vpop.f32.mrb[0].mxu0
        %645 = vmatprep.mubr.bf16.mxu0 0
        %646 = vmatmul.mubr.bf16.gmra.mrb[0].mxu0 %v338
        %v647 = vpop.f32.mrb[0].mxu0
        %v648 = vadd.f32 %v364, %v647
        %v649 = vpop.f32.mrb[0].mxu0
        %v650 = vpop.f32.mrb[0].mxu0
        %v651 = vadd.f32 %v364, %v650
        %v652 = vpop.f32.mrb[0].mxu0
        %653 = vmatprep.mubr.bf16.mxu0 0
        %654 = vmatmul.mubr.bf16.gmra.mrb[0].mxu0 %v339
        %v655 = vpop.f32.mrb[0].mxu0
        %v656 = vadd.f32 %v364, %v655
        %v657 = vpop.f32.mrb[0].mxu0
        %v658 = vpop.f32.mrb[0].mxu0
        %v659 = vadd.f32 %v364, %v658
        %v660 = vpop.f32.mrb[0].mxu0
        %661 = vmatprep.mubr.bf16.mxu0 0
        %662 = vmatmul.mubr.bf16.gmra.mrb[0].mxu0 %v340
        %v663 = vpop.f32.mrb[0].mxu0
        %v664 = vadd.f32 %v364, %v663
        %v665 = vpop.f32.mrb[0].mxu0
        %v666 = vpop.f32.mrb[0].mxu0
        %v667 = vadd.f32 %v364, %v666
        %v668 = vpop.f32.mrb[0].mxu0
        %669 = vmatprep.mubr.bf16.mxu0 0
        %670 = vmatmul.mubr.bf16.gmra.mrb[0].mxu0 %v341
        %v671 = vpop.f32.mrb[0].mxu0
        %v672 = vadd.f32 %v364, %v671
        %v673 = vpop.f32.mrb[0].mxu0
        %v674 = vpop.f32.mrb[0].mxu0
        %v675 = vadd.f32 %v364, %v674
        %v676 = vpop.f32.mrb[0].mxu0
        %677 = vmatprep.mubr.bf16.mxu0 0
        %678 = vmatmul.mubr.bf16.gmra.mrb[0].mxu0 %v342
        %v679 = vpop.f32.mrb[0].mxu0
        %v680 = vadd.f32 %v364, %v679
        %v681 = vpop.f32.mrb[0].mxu0
        %v682 = vpop.f32.mrb[0].mxu0
        %v683 = vadd.f32 %v364, %v682
        %v684 = vpop.f32.mrb[0].mxu0
        %685 = vmatprep.mubr.bf16.mxu0 0
        %686 = vmatmul.mubr.bf16.gmra.mrb[0].mxu0 %v343
        %v687 = vpop.f32.mrb[0].mxu0
        %v688 = vadd.f32 %v364, %v687
        %v689 = vpop.f32.mrb[0].mxu0
        %v690 = vpop.f32.mrb[0].mxu0
        %v691 = vadd.f32 %v364, %v690
        %v692 = vpop.f32.mrb[0].mxu0
        %693 = vmatprep.mubr.bf16.mxu0 0
        %694 = vmatmul.mubr.bf16.gmra.mrb[0].mxu0 %v344
        %v695 = vpop.f32.mrb[0].mxu0
        %v696 = vadd.f32 %v364, %v695
        %v697 = vpop.f32.mrb[0].mxu0
        %v698 = vpop.f32.mrb[0].mxu0
        %v699 = vpop.f32.mrb[0].mxu0
        %700 = vdwg.mxu0
        %v701 = vmul.f32 %v448, 0.5
        %v702 = vmul.f32 %v451, 0.5
        %v703 = vmul.f32 %v456, 0.5
        %v704 = vmul.f32 %v459, 0.5
        %v705 = vmul.f32 %v464, 0.5
        %v706 = vmul.f32 %v467, 0.5
        %v707 = vmul.f32 %v472, 0.5
        %v708 = vmul.f32 %v475, 0.5
        %v709 = vmul.f32 %v480, 0.5
        %v710 = vmul.f32 %v483, 0.5
        %v711 = vmul.f32 %v488, 0.5
        %v712 = vmul.f32 %v491, 0.5
        %v713 = vmul.f32 %v496, 0.5
        %v714 = vmul.f32 %v499, 0.5
        %v715 = vmul.f32 %v504, 0.5
        %v716 = vmul.f32 %v507, 0.5
        %v717 = vmul.f32 %v512, 0.5
        %v718 = vmul.f32 %v515, 0.5
        %v719 = vmul.f32 %v520, 0.5
        %v720 = vmul.f32 %v523, 0.5
        %v721 = vmul.f32 %v528, 0.5
        %v722 = vmul.f32 %v531, 0.5
        %v723 = vmul.f32 %v536, 0.5
        %v724 = vmul.f32 %v539, 0.5
        %v725 = vmul.f32 %v544, 0.5
        %v726 = vmul.f32 %v547, 0.5
        %v727 = vmul.f32 %v552, 0.5
        %v728 = vmul.f32 %v555, 0.5
        %v729 = vmul.f32 %v560, 0.5
        %v730 = vmul.f32 %v563, 0.5
        %v731 = vmul.f32 %v568, 0.5
        %v732 = vmul.f32 %v571, 0.5
        %v733 = vmul.f32 %v576, 0.5
        %v734 = vmul.f32 %v579, 0.5
        %v735 = vmul.f32 %v584, 0.5
        %v736 = vmul.f32 %v587, 0.5
        %v737 = vmul.f32 %v592, 0.5
        %v738 = vmul.f32 %v595, 0.5
        %v739 = vmul.f32 %v600, 0.5
        %v740 = vmul.f32 %v603, 0.5
        %v741 = vmul.f32 %v608, 0.5
        %v742 = vmul.f32 %v611, 0.5
        %v743 = vmul.f32 %v616, 0.5
        %v744 = vmul.f32 %v619, 0.5
        %v745 = vmul.f32 %v624, 0.5
        %v746 = vmul.f32 %v627, 0.5
        %v747 = vmul.f32 %v632, 0.5
        %v748 = vmul.f32 %v635, 0.5
        %v749 = vmul.f32 %v640, 0.5
        %v750 = vmul.f32 %v643, 0.5
        %v751 = vmul.f32 %v648, 0.5
        %v752 = vmul.f32 %v651, 0.5
        %v753 = vmul.f32 %v656, 0.5
        %v754 = vmul.f32 %v659, 0.5
        %v755 = vmul.f32 %v664, 0.5
        %v756 = vmul.f32 %v667, 0.5
        %v757 = vmul.f32 %v672, 0.5
        %v758 = vmul.f32 %v675, 0.5
        %v759 = vmul.f32 %v680, 0.5
        %v760 = vmul.f32 %v683, 0.5
        %v761 = vmul.f32 %v688, 0.5
        %v762 = vmul.f32 %v691, 0.5
        %v763 = vmul.f32 %v696, 0.5
        %v764 = vtanh.pop %v701
        %v765 = vtanh.pop %v702
        %v766 = vtanh.pop %v703
        %v767 = vtanh.pop %v704
        %v768 = vtanh.pop %v705
        %v769 = vtanh.pop %v706
        %v770 = vtanh.pop %v707
        %v771 = vtanh.pop %v708
        %v772 = vtanh.pop %v709
        %v773 = vtanh.pop %v710
        %v774 = vtanh.pop %v711
        %v775 = vtanh.pop %v712
        %v776 = vtanh.pop %v713
        %v777 = vtanh.pop %v714
        %v778 = vtanh.pop %v715
        %v779 = vtanh.pop %v716
        %v780 = vtanh.pop %v717
        %v781 = vtanh.pop %v718
        %v782 = vtanh.pop %v719
        %v783 = vtanh.pop %v720
        %v784 = vtanh.pop %v721
        %v785 = vtanh.pop %v722
        %v786 = vtanh.pop %v723
        %v787 = vtanh.pop %v724
        %v788 = vtanh.pop %v725
        %v789 = vtanh.pop %v726
        %v790 = vtanh.pop %v727
        %v791 = vtanh.pop %v728
        %v792 = vtanh.pop %v729
        %v793 = vtanh.pop %v730
        %v794 = vtanh.pop %v731
        %v795 = vtanh.pop %v732
        %v796 = vtanh.pop %v733
        %v797 = vtanh.pop %v734
        %v798 = vtanh.pop %v735
        %v799 = vtanh.pop %v736
        %v800 = vtanh.pop %v737
        %v801 = vtanh.pop %v738
        %v802 = vtanh.pop %v739
        %v803 = vtanh.pop %v740
        %v804 = vtanh.pop %v741
        %v805 = vtanh.pop %v742
        %v806 = vtanh.pop %v743
        %v807 = vtanh.pop %v744
        %v808 = vtanh.pop %v745
        %v809 = vtanh.pop %v746
        %v810 = vtanh.pop %v747
        %v811 = vtanh.pop %v748
        %v812 = vtanh.pop %v749
        %v813 = vtanh.pop %v750
        %v814 = vtanh.pop %v751
        %v815 = vtanh.pop %v752
        %v816 = vtanh.pop %v753
        %v817 = vtanh.pop %v754
        %v818 = vtanh.pop %v755
        %v819 = vtanh.pop %v756
        %v820 = vtanh.pop %v757
        %v821 = vtanh.pop %v758
        %v822 = vtanh.pop %v759
        %v823 = vtanh.pop %v760
        %v824 = vtanh.pop %v761
        %v825 = vtanh.pop %v762
        %v826 = vtanh.pop %v763
        %v827 = vmul.f32 %v764, 0.5
        %v828 = vmul.f32 %v765, 0.5
        %v829 = vmul.f32 %v766, 0.5
        %v830 = vmul.f32 %v767, 0.5
        %v831 = vmul.f32 %v768, 0.5
        %v832 = vmul.f32 %v769, 0.5
        %v833 = vmul.f32 %v770, 0.5
        %v834 = vmul.f32 %v771, 0.5
        %v835 = vmul.f32 %v772, 0.5
        %v836 = vmul.f32 %v773, 0.5
        %v837 = vmul.f32 %v774, 0.5
        %v838 = vmul.f32 %v775, 0.5
        %v839 = vmul.f32 %v776, 0.5
        %v840 = vmul.f32 %v777, 0.5
        %v841 = vmul.f32 %v778, 0.5
        %v842 = vmul.f32 %v779, 0.5
        %v843 = vmul.f32 %v780, 0.5
        %v844 = vmul.f32 %v781, 0.5
        %v845 = vmul.f32 %v782, 0.5
        %v846 = vmul.f32 %v783, 0.5
        %v847 = vmul.f32 %v784, 0.5
        %v848 = vmul.f32 %v785, 0.5
        %v849 = vmul.f32 %v786, 0.5
        %v850 = vmul.f32 %v787, 0.5
        %v851 = vmul.f32 %v788, 0.5
        %v852 = vmul.f32 %v789, 0.5
        %v853 = vmul.f32 %v790, 0.5
        %v854 = vmul.f32 %v791, 0.5
        %v855 = vmul.f32 %v792, 0.5
        %v856 = vmul.f32 %v793, 0.5
        %v857 = vmul.f32 %v794, 0.5
        %v858 = vmul.f32 %v795, 0.5
        %v859 = vmul.f32 %v796, 0.5
        %v860 = vmul.f32 %v797, 0.5
        %v861 = vmul.f32 %v798, 0.5
        %v862 = vmul.f32 %v799, 0.5
        %v863 = vmul.f32 %v800, 0.5
        %v864 = vmul.f32 %v801, 0.5
        %v865 = vmul.f32 %v802, 0.5
        %v866 = vmul.f32 %v803, 0.5
        %v867 = vmul.f32 %v804, 0.5
        %v868 = vmul.f32 %v805, 0.5
        %v869 = vmul.f32 %v806, 0.5
        %v870 = vmul.f32 %v807, 0.5
        %v871 = vmul.f32 %v808, 0.5
        %v872 = vmul.f32 %v809, 0.5
        %v873 = vmul.f32 %v810, 0.5
        %v874 = vmul.f32 %v811, 0.5
        %v875 = vmul.f32 %v812, 0.5
        %v876 = vmul.f32 %v813, 0.5
        %v877 = vmul.f32 %v814, 0.5
        %v878 = vmul.f32 %v815, 0.5
        %v879 = vmul.f32 %v816, 0.5
        %v880 = vmul.f32 %v817, 0.5
        %v881 = vmul.f32 %v818, 0.5
        %v882 = vmul.f32 %v819, 0.5
        %v883 = vmul.f32 %v820, 0.5
        %v884 = vmul.f32 %v821, 0.5
        %v885 = vmul.f32 %v822, 0.5
        %v886 = vmul.f32 %v823, 0.5
        %v887 = vmul.f32 %v824, 0.5
        %v888 = vmul.f32 %v825, 0.5
        %v889 = vmul.f32 %v826, 0.5
        %v890 = vadd.f32 %v827, 0.5
        %v891 = vadd.f32 %v828, 0.5
        %v892 = vadd.f32 %v829, 0.5
        %v893 = vadd.f32 %v830, 0.5
        %v894 = vadd.f32 %v831, 0.5
        %v895 = vadd.f32 %v832, 0.5
        %v896 = vadd.f32 %v833, 0.5
        %v897 = vadd.f32 %v834, 0.5
        %v898 = vadd.f32 %v835, 0.5
        %v899 = vadd.f32 %v836, 0.5
        %v900 = vadd.f32 %v837, 0.5
        %v901 = vadd.f32 %v838, 0.5
        %v902 = vadd.f32 %v839, 0.5
        %v903 = vadd.f32 %v840, 0.5
        %v904 = vadd.f32 %v841, 0.5
        %v905 = vadd.f32 %v842, 0.5
        %v906 = vadd.f32 %v843, 0.5
        %v907 = vadd.f32 %v844, 0.5
        %v908 = vadd.f32 %v845, 0.5
        %v909 = vadd.f32 %v846, 0.5
        %v910 = vadd.f32 %v847, 0.5
        %v911 = vadd.f32 %v848, 0.5
        %v912 = vadd.f32 %v849, 0.5
        %v913 = vadd.f32 %v850, 0.5
        %v914 = vadd.f32 %v851, 0.5
        %v915 = vadd.f32 %v852, 0.5
        %v916 = vadd.f32 %v853, 0.5
        %v917 = vadd.f32 %v854, 0.5
        %v918 = vadd.f32 %v855, 0.5
        %v919 = vadd.f32 %v856, 0.5
        %v920 = vadd.f32 %v857, 0.5
        %v921 = vadd.f32 %v858, 0.5
        %v922 = vadd.f32 %v859, 0.5
        %v923 = vadd.f32 %v860, 0.5
        %v924 = vadd.f32 %v861, 0.5
        %v925 = vadd.f32 %v862, 0.5
        %v926 = vadd.f32 %v863, 0.5
        %v927 = vadd.f32 %v864, 0.5
        %v928 = vadd.f32 %v865, 0.5
        %v929 = vadd.f32 %v866, 0.5
        %v930 = vadd.f32 %v867, 0.5
        %v931 = vadd.f32 %v868, 0.5
        %v932 = vadd.f32 %v869, 0.5
        %v933 = vadd.f32 %v870, 0.5
        %v934 = vadd.f32 %v871, 0.5
        %v935 = vadd.f32 %v872, 0.5
        %v936 = vadd.f32 %v873, 0.5
        %v937 = vadd.f32 %v874, 0.5
        %v938 = vadd.f32 %v875, 0.5
        %v939 = vadd.f32 %v876, 0.5
        %v940 = vadd.f32 %v877, 0.5
        %v941 = vadd.f32 %v878, 0.5
        %v942 = vadd.f32 %v879, 0.5
        %v943 = vadd.f32 %v880, 0.5
        %v944 = vadd.f32 %v881, 0.5
        %v945 = vadd.f32 %v882, 0.5
        %v946 = vadd.f32 %v883, 0.5
        %v947 = vadd.f32 %v884, 0.5
        %v948 = vadd.f32 %v885, 0.5
        %v949 = vadd.f32 %v886, 0.5
        %v950 = vadd.f32 %v887, 0.5
        %v951 = vadd.f32 %v888, 0.5
        %v952 = vadd.f32 %v889, 0.5
        %v953 = vmul.f32 %v448, %v890
        %v954 = vmul.f32 %v451, %v891
        %v955 = vmul.f32 %v456, %v892
        %v956 = vmul.f32 %v459, %v893
        %v957 = vmul.f32 %v464, %v894
        %v958 = vmul.f32 %v467, %v895
        %v959 = vmul.f32 %v472, %v896
        %v960 = vmul.f32 %v475, %v897
        %v961 = vmul.f32 %v480, %v898
        %v962 = vmul.f32 %v483, %v899
        %v963 = vmul.f32 %v488, %v900
        %v964 = vmul.f32 %v491, %v901
        %v965 = vmul.f32 %v496, %v902
        %v966 = vmul.f32 %v499, %v903
        %v967 = vmul.f32 %v504, %v904
        %v968 = vmul.f32 %v507, %v905
        %v969 = vmul.f32 %v512, %v906
        %v970 = vmul.f32 %v515, %v907
        %v971 = vmul.f32 %v520, %v908
        %v972 = vmul.f32 %v523, %v909
        %v973 = vmul.f32 %v528, %v910
        %v974 = vmul.f32 %v531, %v911
        %v975 = vmul.f32 %v536, %v912
        %v976 = vmul.f32 %v539, %v913
        %v977 = vmul.f32 %v544, %v914
        %v978 = vmul.f32 %v547, %v915
        %v979 = vmul.f32 %v552, %v916
        %v980 = vmul.f32 %v555, %v917
        %v981 = vmul.f32 %v560, %v918
        %v982 = vmul.f32 %v563, %v919
        %v983 = vmul.f32 %v568, %v920
        %v984 = vmul.f32 %v571, %v921
        %v985 = vmul.f32 %v576, %v922
        %v986 = vmul.f32 %v579, %v923
        %v987 = vmul.f32 %v584, %v924
        %v988 = vmul.f32 %v587, %v925
        %v989 = vmul.f32 %v592, %v926
        %v990 = vmul.f32 %v595, %v927
        %v991 = vmul.f32 %v600, %v928
        %v992 = vmul.f32 %v603, %v929
        %v993 = vmul.f32 %v608, %v930
        %v994 = vmul.f32 %v611, %v931
        %v995 = vmul.f32 %v616, %v932
        %v996 = vmul.f32 %v619, %v933
        %v997 = vmul.f32 %v624, %v934
        %v998 = vmul.f32 %v627, %v935
        %v999 = vmul.f32 %v632, %v936
        %v1000 = vmul.f32 %v635, %v937
        %v1001 = vmul.f32 %v640, %v938
        %v1002 = vmul.f32 %v643, %v939
        %v1003 = vmul.f32 %v648, %v940
        %v1004 = vmul.f32 %v651, %v941
        %v1005 = vmul.f32 %v656, %v942
        %v1006 = vmul.f32 %v659, %v943
        %v1007 = vmul.f32 %v664, %v944
        %v1008 = vmul.f32 %v667, %v945
        %v1009 = vmul.f32 %v672, %v946
        %v1010 = vmul.f32 %v675, %v947
        %v1011 = vmul.f32 %v680, %v948
        %v1012 = vmul.f32 %v683, %v949
        %v1013 = vmul.f32 %v688, %v950
        %v1014 = vmul.f32 %v691, %v951
        %v1015 = vmul.f32 %v696, %v952
        %v1016 = vpack.c.bf16 %v954, %v953
        %v1017 = vpack.c.bf16 %v956, %v955
        %v1018 = vpack.c.bf16 %v958, %v957
        %v1019 = vpack.c.bf16 %v960, %v959
        %v1020 = vpack.c.bf16 %v962, %v961
        %v1021 = vpack.c.bf16 %v964, %v963
        %v1022 = vpack.c.bf16 %v966, %v965
        %v1023 = vpack.c.bf16 %v968, %v967
        %v1024 = vpack.c.bf16 %v970, %v969
        %v1025 = vpack.c.bf16 %v972, %v971
        %v1026 = vpack.c.bf16 %v974, %v973
        %v1027 = vpack.c.bf16 %v976, %v975
        %v1028 = vpack.c.bf16 %v978, %v977
        %v1029 = vpack.c.bf16 %v980, %v979
        %v1030 = vpack.c.bf16 %v982, %v981
        %v1031 = vpack.c.bf16 %v984, %v983
        %v1032 = vpack.c.bf16 %v986, %v985
        %v1033 = vpack.c.bf16 %v988, %v987
        %v1034 = vpack.c.bf16 %v990, %v989
        %v1035 = vpack.c.bf16 %v992, %v991
        %v1036 = vpack.c.bf16 %v994, %v993
        %v1037 = vpack.c.bf16 %v996, %v995
        %v1038 = vpack.c.bf16 %v998, %v997
        %v1039 = vpack.c.bf16 %v1000, %v999
        %v1040 = vpack.c.bf16 %v1002, %v1001
        %v1041 = vpack.c.bf16 %v1004, %v1003
        %v1042 = vpack.c.bf16 %v1006, %v1005
        %v1043 = vpack.c.bf16 %v1008, %v1007
        %v1044 = vpack.c.bf16 %v1010, %v1009
        %v1045 = vpack.c.bf16 %v1012, %v1011
        %v1046 = vpack.c.bf16 %v1014, %v1013
        %v1047 = vpack.c.bf16 %v1015, %v1015
        %v1048 = vld [vmem:[#allocation7] sm:$0xf]
        %v1049 = vld [vmem:[#allocation7 + $0x4] sm:$0xf]
        %v1050 = vld [vmem:[#allocation7 + $0x8] sm:$0xf]
        %v1051 = vld [vmem:[#allocation7 + $0xc] sm:$0xf]
        %v1052 = vld [vmem:[#allocation7 + $0x10] sm:$0xf]
        %v1053 = vld [vmem:[#allocation7 + $0x14] sm:$0xf]
        %v1054 = vld [vmem:[#allocation7 + $0x18] sm:$0xf]
        %v1055 = vld [vmem:[#allocation7 + $0x1c] sm:$0xf]
        %v1056 = vld [vmem:[#allocation7 + $0x20] sm:$0xf]
        %v1057 = vld [vmem:[#allocation7 + $0x24] sm:$0xf]
        %v1058 = vld [vmem:[#allocation7 + $0x28] sm:$0xf]
        %v1059 = vld [vmem:[#allocation7 + $0x2c] sm:$0xf]
        %v1060 = vld [vmem:[#allocation7 + $0x30] sm:$0xf]
        %v1061 = vld [vmem:[#allocation7 + $0x34] sm:$0xf]
        %v1062 = vld [vmem:[#allocation7 + $0x38] sm:$0xf]
        %v1063 = vld [vmem:[#allocation7 + $0x3c] sm:$0xf]
        %v1064 = vlaneseq
        %v1065 = vshrl.u32 %v1064, 7
        %v1066 = vsub.s32 0, %v1065
        %v1067 = vrot.slane %v312, %v1066
        %v1084 = vunpack.c.l.b16 %v1048
        %v1085 = vunpack.c.l.b16 %v1049
        %v1086 = vunpack.c.l.b16 %v1050
        %v1087 = vunpack.c.l.b16 %v1051
        %v1088 = vunpack.c.l.b16 %v1052
        %v1089 = vunpack.c.l.b16 %v1053
        %v1090 = vunpack.c.l.b16 %v1054
        %v1091 = vunpack.c.l.b16 %v1055
        %v1092 = vunpack.c.l.b16 %v1056
        %v1093 = vunpack.c.l.b16 %v1057
        %v1094 = vunpack.c.l.b16 %v1058
        %v1095 = vunpack.c.l.b16 %v1059
        %v1096 = vunpack.c.l.b16 %v1060
        %v1097 = vunpack.c.l.b16 %v1061
        %v1098 = vunpack.c.l.b16 %v1062
        %v1099 = vunpack.c.l.b16 %v1063
        %v1100 = vpack.c.b16 %v1085, %v1084
        %v1101 = vpack.c.b16 %v1087, %v1086
        %v1102 = vpack.c.b16 %v1089, %v1088
        %v1103 = vpack.c.b16 %v1091, %v1090
        %v1104 = vpack.c.b16 %v1093, %v1092
        %v1105 = vpack.c.b16 %v1095, %v1094
        %v1106 = vpack.c.b16 %v1097, %v1096
        %v1107 = vpack.c.b16 %v1099, %v1098
        %1116 = vmatprep.subr.bf16.mxu0 0
        %1117 = vmatpush1.bf16.msra.mxu0 %v1100
        %1118 = vmatprep.subr.bf16.mxu0 0
        %1119 = vmatpush1.bf16.msra.mxu0 %v1101
        %1120 = vmatprep.subr.bf16.mxu0 0
        %1121 = vmatpush1.bf16.msra.mxu0 %v1102
        %1122 = vmatprep.subr.bf16.mxu0 0
        %1123 = vmatpush1.bf16.msra.mxu0 %v1103
        %1124 = vmatprep.subr.bf16.mxu0 0
        %1125 = vmatpush1.bf16.msra.mxu0 %v1104
        %1126 = vmatprep.subr.bf16.mxu0 0
        %1127 = vmatpush1.bf16.msra.mxu0 %v1105
        %1128 = vmatprep.subr.bf16.mxu0 0
        %1129 = vmatpush1.bf16.msra.mxu0 %v1106
        %1130 = vmatprep.subr.bf16.mxu0 0
        %1131 = vmatpush1.bf16.msra.mxu0 %v1107
        %1132 = vmatprep.subr.bf16.mxu0 0
        %1133 = vmatpush1.bf16.msra.mxu0 0
        %1134 = vmatprep.subr.bf16.mxu0 0
        %1135 = vmatpush1.bf16.msra.mxu0 0
        %1136 = vmatprep.subr.bf16.mxu0 0
        %1137 = vmatpush1.bf16.msra.mxu0 0
        %1138 = vmatprep.subr.bf16.mxu0 0
        %1139 = vmatpush1.bf16.msra.mxu0 0
        %1140 = vmatprep.subr.bf16.mxu0 0
        %1141 = vmatpush1.bf16.msra.mxu0 0
        %1142 = vmatprep.subr.bf16.mxu0 0
        %1143 = vmatpush1.bf16.msra.mxu0 0
        %1144 = vmatprep.subr.bf16.mxu0 0
        %1145 = vmatpush1.bf16.msra.mxu0 0
        %1146 = vmatprep.subr.bf16.mxu0 0
        %1147 = vmatpush1.bf16.msra.mxu0 0
        %1148 = vmatprep.mubr.bf16.mxu0 0
        %1149 = vmatmul.mubr.bf16.gmra.mrb[0].mxu0 %v1016
        %v1150 = vpop.f32.mrb[0].mxu0
        %v1151 = vadd.f32 %v1067, %v1150
        %v1152 = vpop.f32.mrb[0].mxu0
        %v1153 = vpop.f32.mrb[0].mxu0
        %v1154 = vadd.f32 %v1067, %v1153
        %v1155 = vpop.f32.mrb[0].mxu0
        %1156 = vmatprep.mubr.bf16.mxu0 0
        %1157 = vmatmul.mubr.bf16.gmra.mrb[0].mxu0 %v1017
        %v1158 = vpop.f32.mrb[0].mxu0
        %v1159 = vadd.f32 %v1067, %v1158
        %v1160 = vpop.f32.mrb[0].mxu0
        %v1161 = vpop.f32.mrb[0].mxu0
        %v1162 = vadd.f32 %v1067, %v1161
        %v1163 = vpop.f32.mrb[0].mxu0
        %1164 = vmatprep.mubr.bf16.mxu0 0
        %1165 = vmatmul.mubr.bf16.gmra.mrb[0].mxu0 %v1018
        %v1166 = vpop.f32.mrb[0].mxu0
        %v1167 = vadd.f32 %v1067, %v1166
        %v1168 = vpop.f32.mrb[0].mxu0
        %v1169 = vpop.f32.mrb[0].mxu0
        %v1170 = vadd.f32 %v1067, %v1169
        %v1171 = vpop.f32.mrb[0].mxu0
        %1172 = vmatprep.mubr.bf16.mxu0 0
        %1173 = vmatmul.mubr.bf16.gmra.mrb[0].mxu0 %v1019
        %v1174 = vpop.f32.mrb[0].mxu0
        %v1175 = vadd.f32 %v1067, %v1174
        %v1176 = vpop.f32.mrb[0].mxu0
        %v1177 = vpop.f32.mrb[0].mxu0
        %v1178 = vadd.f32 %v1067, %v1177
        %v1179 = vpop.f32.mrb[0].mxu0
        %1180 = vmatprep.mubr.bf16.mxu0 0
        %1181 = vmatmul.mubr.bf16.gmra.mrb[0].mxu0 %v1020
        %v1182 = vpop.f32.mrb[0].mxu0
        %v1183 = vadd.f32 %v1067, %v1182
        %v1184 = vpop.f32.mrb[0].mxu0
        %v1185 = vpop.f32.mrb[0].mxu0
        %v1186 = vadd.f32 %v1067, %v1185
        %v1187 = vpop.f32.mrb[0].mxu0
        %1188 = vmatprep.mubr.bf16.mxu0 0
        %1189 = vmatmul.mubr.bf16.gmra.mrb[0].mxu0 %v1021
        %v1190 = vpop.f32.mrb[0].mxu0
        %v1191 = vadd.f32 %v1067, %v1190
        %v1192 = vpop.f32.mrb[0].mxu0
        %v1193 = vpop.f32.mrb[0].mxu0
        %v1194 = vadd.f32 %v1067, %v1193
        %v1195 = vpop.f32.mrb[0].mxu0
        %1196 = vmatprep.mubr.bf16.mxu0 0
        %1197 = vmatmul.mubr.bf16.gmra.mrb[0].mxu0 %v1022
        %v1198 = vpop.f32.mrb[0].mxu0
        %v1199 = vadd.f32 %v1067, %v1198
        %v1200 = vpop.f32.mrb[0].mxu0
        %v1201 = vpop.f32.mrb[0].mxu0
        %v1202 = vadd.f32 %v1067, %v1201
        %v1203 = vpop.f32.mrb[0].mxu0
        %1204 = vmatprep.mubr.bf16.mxu0 0
        %1205 = vmatmul.mubr.bf16.gmra.mrb[0].mxu0 %v1023
        %v1206 = vpop.f32.mrb[0].mxu0
        %v1207 = vadd.f32 %v1067, %v1206
        %v1208 = vpop.f32.mrb[0].mxu0
        %v1209 = vpop.f32.mrb[0].mxu0
        %v1210 = vadd.f32 %v1067, %v1209
        %v1211 = vpop.f32.mrb[0].mxu0
        %1212 = vmatprep.mubr.bf16.mxu0 0
        %1213 = vmatmul.mubr.bf16.gmra.mrb[0].mxu0 %v1024
        %v1214 = vpop.f32.mrb[0].mxu0
        %v1215 = vadd.f32 %v1067, %v1214
        %v1216 = vpop.f32.mrb[0].mxu0
        %v1217 = vpop.f32.mrb[0].mxu0
        %v1218 = vadd.f32 %v1067, %v1217
        %v1219 = vpop.f32.mrb[0].mxu0
        %1220 = vmatprep.mubr.bf16.mxu0 0
        %1221 = vmatmul.mubr.bf16.gmra.mrb[0].mxu0 %v1025
        %v1222 = vpop.f32.mrb[0].mxu0
        %v1223 = vadd.f32 %v1067, %v1222
        %v1224 = vpop.f32.mrb[0].mxu0
        %v1225 = vpop.f32.mrb[0].mxu0
        %v1226 = vadd.f32 %v1067, %v1225
        %v1227 = vpop.f32.mrb[0].mxu0
        %1228 = vmatprep.mubr.bf16.mxu0 0
        %1229 = vmatmul.mubr.bf16.gmra.mrb[0].mxu0 %v1026
        %v1230 = vpop.f32.mrb[0].mxu0
        %v1231 = vadd.f32 %v1067, %v1230
        %v1232 = vpop.f32.mrb[0].mxu0
        %v1233 = vpop.f32.mrb[0].mxu0
        %v1234 = vadd.f32 %v1067, %v1233
        %v1235 = vpop.f32.mrb[0].mxu0
        %1236 = vmatprep.mubr.bf16.mxu0 0
        %1237 = vmatmul.mubr.bf16.gmra.mrb[0].mxu0 %v1027
        %v1238 = vpop.f32.mrb[0].mxu0
        %v1239 = vadd.f32 %v1067, %v1238
        %v1240 = vpop.f32.mrb[0].mxu0
        %v1241 = vpop.f32.mrb[0].mxu0
        %v1242 = vadd.f32 %v1067, %v1241
        %v1243 = vpop.f32.mrb[0].mxu0
        %1244 = vmatprep.mubr.bf16.mxu0 0
        %1245 = vmatmul.mubr.bf16.gmra.mrb[0].mxu0 %v1028
        %v1246 = vpop.f32.mrb[0].mxu0
        %v1247 = vadd.f32 %v1067, %v1246
        %v1248 = vpop.f32.mrb[0].mxu0
        %v1249 = vpop.f32.mrb[0].mxu0
        %v1250 = vadd.f32 %v1067, %v1249
        %v1251 = vpop.f32.mrb[0].mxu0
        %1252 = vmatprep.mubr.bf16.mxu0 0
        %1253 = vmatmul.mubr.bf16.gmra.mrb[0].mxu0 %v1029
        %v1254 = vpop.f32.mrb[0].mxu0
        %v1255 = vadd.f32 %v1067, %v1254
        %v1256 = vpop.f32.mrb[0].mxu0
        %v1257 = vpop.f32.mrb[0].mxu0
        %v1258 = vadd.f32 %v1067, %v1257
        %v1259 = vpop.f32.mrb[0].mxu0
        %1260 = vmatprep.mubr.bf16.mxu0 0
        %1261 = vmatmul.mubr.bf16.gmra.mrb[0].mxu0 %v1030
        %v1262 = vpop.f32.mrb[0].mxu0
        %v1263 = vadd.f32 %v1067, %v1262
        %v1264 = vpop.f32.mrb[0].mxu0
        %v1265 = vpop.f32.mrb[0].mxu0
        %v1266 = vadd.f32 %v1067, %v1265
        %v1267 = vpop.f32.mrb[0].mxu0
        %1268 = vmatprep.mubr.bf16.mxu0 0
        %1269 = vmatmul.mubr.bf16.gmra.mrb[0].mxu0 %v1031
        %v1270 = vpop.f32.mrb[0].mxu0
        %v1271 = vadd.f32 %v1067, %v1270
        %v1272 = vpop.f32.mrb[0].mxu0
        %v1273 = vpop.f32.mrb[0].mxu0
        %v1274 = vadd.f32 %v1067, %v1273
        %v1275 = vpop.f32.mrb[0].mxu0
        %1276 = vmatprep.mubr.bf16.mxu0 0
        %1277 = vmatmul.mubr.bf16.gmra.mrb[0].mxu0 %v1032
        %v1278 = vpop.f32.mrb[0].mxu0
        %v1279 = vadd.f32 %v1067, %v1278
        %v1280 = vpop.f32.mrb[0].mxu0
        %v1281 = vpop.f32.mrb[0].mxu0
        %v1282 = vadd.f32 %v1067, %v1281
        %v1283 = vpop.f32.mrb[0].mxu0
        %1284 = vmatprep.mubr.bf16.mxu0 0
        %1285 = vmatmul.mubr.bf16.gmra.mrb[0].mxu0 %v1033
        %v1286 = vpop.f32.mrb[0].mxu0
        %v1287 = vadd.f32 %v1067, %v1286
        %v1288 = vpop.f32.mrb[0].mxu0
        %v1289 = vpop.f32.mrb[0].mxu0
        %v1290 = vadd.f32 %v1067, %v1289
        %v1291 = vpop.f32.mrb[0].mxu0
        %1292 = vmatprep.mubr.bf16.mxu0 0
        %1293 = vmatmul.mubr.bf16.gmra.mrb[0].mxu0 %v1034
        %v1294 = vpop.f32.mrb[0].mxu0
        %v1295 = vadd.f32 %v1067, %v1294
        %v1296 = vpop.f32.mrb[0].mxu0
        %v1297 = vpop.f32.mrb[0].mxu0
        %v1298 = vadd.f32 %v1067, %v1297
        %v1299 = vpop.f32.mrb[0].mxu0
        %1300 = vmatprep.mubr.bf16.mxu0 0
        %1301 = vmatmul.mubr.bf16.gmra.mrb[0].mxu0 %v1035
        %v1302 = vpop.f32.mrb[0].mxu0
        %v1303 = vadd.f32 %v1067, %v1302
        %v1304 = vpop.f32.mrb[0].mxu0
        %v1305 = vpop.f32.mrb[0].mxu0
        %v1306 = vadd.f32 %v1067, %v1305
        %v1307 = vpop.f32.mrb[0].mxu0
        %1308 = vmatprep.mubr.bf16.mxu0 0
        %1309 = vmatmul.mubr.bf16.gmra.mrb[0].mxu0 %v1036
        %v1310 = vpop.f32.mrb[0].mxu0
        %v1311 = vadd.f32 %v1067, %v1310
        %v1312 = vpop.f32.mrb[0].mxu0
        %v1313 = vpop.f32.mrb[0].mxu0
        %v1314 = vadd.f32 %v1067, %v1313
        %v1315 = vpop.f32.mrb[0].mxu0
        %1316 = vmatprep.mubr.bf16.mxu0 0
        %1317 = vmatmul.mubr.bf16.gmra.mrb[0].mxu0 %v1037
        %v1318 = vpop.f32.mrb[0].mxu0
        %v1319 = vadd.f32 %v1067, %v1318
        %v1320 = vpop.f32.mrb[0].mxu0
        %v1321 = vpop.f32.mrb[0].mxu0
        %v1322 = vadd.f32 %v1067, %v1321
        %v1323 = vpop.f32.mrb[0].mxu0
        %1324 = vmatprep.mubr.bf16.mxu0 0
        %1325 = vmatmul.mubr.bf16.gmra.mrb[0].mxu0 %v1038
        %v1326 = vpop.f32.mrb[0].mxu0
        %v1327 = vadd.f32 %v1067, %v1326
        %v1328 = vpop.f32.mrb[0].mxu0
        %v1329 = vpop.f32.mrb[0].mxu0
        %v1330 = vadd.f32 %v1067, %v1329
        %v1331 = vpop.f32.mrb[0].mxu0
        %1332 = vmatprep.mubr.bf16.mxu0 0
        %1333 = vmatmul.mubr.bf16.gmra.mrb[0].mxu0 %v1039
        %v1334 = vpop.f32.mrb[0].mxu0
        %v1335 = vadd.f32 %v1067, %v1334
        %v1336 = vpop.f32.mrb[0].mxu0
        %v1337 = vpop.f32.mrb[0].mxu0
        %v1338 = vadd.f32 %v1067, %v1337
        %v1339 = vpop.f32.mrb[0].mxu0
        %1340 = vmatprep.mubr.bf16.mxu0 0
        %1341 = vmatmul.mubr.bf16.gmra.mrb[0].mxu0 %v1040
        %v1342 = vpop.f32.mrb[0].mxu0
        %v1343 = vadd.f32 %v1067, %v1342
        %v1344 = vpop.f32.mrb[0].mxu0
        %v1345 = vpop.f32.mrb[0].mxu0
        %v1346 = vadd.f32 %v1067, %v1345
        %v1347 = vpop.f32.mrb[0].mxu0
        %1348 = vmatprep.mubr.bf16.mxu0 0
        %1349 = vmatmul.mubr.bf16.gmra.mrb[0].mxu0 %v1041
        %v1350 = vpop.f32.mrb[0].mxu0
        %v1351 = vadd.f32 %v1067, %v1350
        %v1352 = vpop.f32.mrb[0].mxu0
        %v1353 = vpop.f32.mrb[0].mxu0
        %v1354 = vadd.f32 %v1067, %v1353
        %v1355 = vpop.f32.mrb[0].mxu0
        %1356 = vmatprep.mubr.bf16.mxu0 0
        %1357 = vmatmul.mubr.bf16.gmra.mrb[0].mxu0 %v1042
        %v1358 = vpop.f32.mrb[0].mxu0
        %v1359 = vadd.f32 %v1067, %v1358
        %v1360 = vpop.f32.mrb[0].mxu0
        %v1361 = vpop.f32.mrb[0].mxu0
        %v1362 = vadd.f32 %v1067, %v1361
        %v1363 = vpop.f32.mrb[0].mxu0
        %1364 = vmatprep.mubr.bf16.mxu0 0
        %1365 = vmatmul.mubr.bf16.gmra.mrb[0].mxu0 %v1043
        %v1366 = vpop.f32.mrb[0].mxu0
        %v1367 = vadd.f32 %v1067, %v1366
        %v1368 = vpop.f32.mrb[0].mxu0
        %v1369 = vpop.f32.mrb[0].mxu0
        %v1370 = vadd.f32 %v1067, %v1369
        %v1371 = vpop.f32.mrb[0].mxu0
        %1372 = vmatprep.mubr.bf16.mxu0 0
        %1373 = vmatmul.mubr.bf16.gmra.mrb[0].mxu0 %v1044
        %v1374 = vpop.f32.mrb[0].mxu0
        %v1375 = vadd.f32 %v1067, %v1374
        %v1376 = vpop.f32.mrb[0].mxu0
        %v1377 = vpop.f32.mrb[0].mxu0
        %v1378 = vadd.f32 %v1067, %v1377
        %v1379 = vpop.f32.mrb[0].mxu0
        %1380 = vmatprep.mubr.bf16.mxu0 0
        %1381 = vmatmul.mubr.bf16.gmra.mrb[0].mxu0 %v1045
        %v1382 = vpop.f32.mrb[0].mxu0
        %v1383 = vadd.f32 %v1067, %v1382
        %v1384 = vpop.f32.mrb[0].mxu0
        %v1385 = vpop.f32.mrb[0].mxu0
        %v1386 = vadd.f32 %v1067, %v1385
        %v1387 = vpop.f32.mrb[0].mxu0
        %1388 = vmatprep.mubr.bf16.mxu0 0
        %1389 = vmatmul.mubr.bf16.gmra.mrb[0].mxu0 %v1046
        %v1390 = vpop.f32.mrb[0].mxu0
        %v1391 = vadd.f32 %v1067, %v1390
        %v1392 = vpop.f32.mrb[0].mxu0
        %v1393 = vpop.f32.mrb[0].mxu0
        %v1394 = vadd.f32 %v1067, %v1393
        %v1395 = vpop.f32.mrb[0].mxu0
        %1396 = vmatprep.mubr.bf16.mxu0 0
        %1397 = vmatmul.mubr.bf16.gmra.mrb[0].mxu0 %v1047
        %v1398 = vpop.f32.mrb[0].mxu0
        %v1399 = vadd.f32 %v1067, %v1398
        %v1400 = vpop.f32.mrb[0].mxu0
        %v1401 = vpop.f32.mrb[0].mxu0
        %v1402 = vpop.f32.mrb[0].mxu0
        %1403 = vdwg.mxu0
        %v1404 = vmul.f32 %v1151, 0.5
        %v1405 = vmul.f32 %v1154, 0.5
        %v1406 = vmul.f32 %v1159, 0.5
        %v1407 = vmul.f32 %v1162, 0.5
        %v1408 = vmul.f32 %v1167, 0.5
        %v1409 = vmul.f32 %v1170, 0.5
        %v1410 = vmul.f32 %v1175, 0.5
        %v1411 = vmul.f32 %v1178, 0.5
        %v1412 = vmul.f32 %v1183, 0.5
        %v1413 = vmul.f32 %v1186, 0.5
        %v1414 = vmul.f32 %v1191, 0.5
        %v1415 = vmul.f32 %v1194, 0.5
        %v1416 = vmul.f32 %v1199, 0.5
        %v1417 = vmul.f32 %v1202, 0.5
        %v1418 = vmul.f32 %v1207, 0.5
        %v1419 = vmul.f32 %v1210, 0.5
        %v1420 = vmul.f32 %v1215, 0.5
        %v1421 = vmul.f32 %v1218, 0.5
        %v1422 = vmul.f32 %v1223, 0.5
        %v1423 = vmul.f32 %v1226, 0.5
        %v1424 = vmul.f32 %v1231, 0.5
        %v1425 = vmul.f32 %v1234, 0.5
        %v1426 = vmul.f32 %v1239, 0.5
        %v1427 = vmul.f32 %v1242, 0.5
        %v1428 = vmul.f32 %v1247, 0.5
        %v1429 = vmul.f32 %v1250, 0.5
        %v1430 = vmul.f32 %v1255, 0.5
        %v1431 = vmul.f32 %v1258, 0.5
        %v1432 = vmul.f32 %v1263, 0.5
        %v1433 = vmul.f32 %v1266, 0.5
        %v1434 = vmul.f32 %v1271, 0.5
        %v1435 = vmul.f32 %v1274, 0.5
        %v1436 = vmul.f32 %v1279, 0.5
        %v1437 = vmul.f32 %v1282, 0.5
        %v1438 = vmul.f32 %v1287, 0.5
        %v1439 = vmul.f32 %v1290, 0.5
        %v1440 = vmul.f32 %v1295, 0.5
        %v1441 = vmul.f32 %v1298, 0.5
        %v1442 = vmul.f32 %v1303, 0.5
        %v1443 = vmul.f32 %v1306, 0.5
        %v1444 = vmul.f32 %v1311, 0.5
        %v1445 = vmul.f32 %v1314, 0.5
        %v1446 = vmul.f32 %v1319, 0.5
        %v1447 = vmul.f32 %v1322, 0.5
        %v1448 = vmul.f32 %v1327, 0.5
        %v1449 = vmul.f32 %v1330, 0.5
        %v1450 = vmul.f32 %v1335, 0.5
        %v1451 = vmul.f32 %v1338, 0.5
        %v1452 = vmul.f32 %v1343, 0.5
        %v1453 = vmul.f32 %v1346, 0.5
        %v1454 = vmul.f32 %v1351, 0.5
        %v1455 = vmul.f32 %v1354, 0.5
        %v1456 = vmul.f32 %v1359, 0.5
        %v1457 = vmul.f32 %v1362, 0.5
        %v1458 = vmul.f32 %v1367, 0.5
        %v1459 = vmul.f32 %v1370, 0.5
        %v1460 = vmul.f32 %v1375, 0.5
        %v1461 = vmul.f32 %v1378, 0.5
        %v1462 = vmul.f32 %v1383, 0.5
        %v1463 = vmul.f32 %v1386, 0.5
        %v1464 = vmul.f32 %v1391, 0.5
        %v1465 = vmul.f32 %v1394, 0.5
        %v1466 = vmul.f32 %v1399, 0.5
        %v1467 = vtanh.pop %v1404
        %v1468 = vtanh.pop %v1405
        %v1469 = vtanh.pop %v1406
        %v1470 = vtanh.pop %v1407
        %v1471 = vtanh.pop %v1408
        %v1472 = vtanh.pop %v1409
        %v1473 = vtanh.pop %v1410
        %v1474 = vtanh.pop %v1411
        %v1475 = vtanh.pop %v1412
        %v1476 = vtanh.pop %v1413
        %v1477 = vtanh.pop %v1414
        %v1478 = vtanh.pop %v1415
        %v1479 = vtanh.pop %v1416
        %v1480 = vtanh.pop %v1417
        %v1481 = vtanh.pop %v1418
        %v1482 = vtanh.pop %v1419
        %v1483 = vtanh.pop %v1420
        %v1484 = vtanh.pop %v1421
        %v1485 = vtanh.pop %v1422
        %v1486 = vtanh.pop %v1423
        %v1487 = vtanh.pop %v1424
        %v1488 = vtanh.pop %v1425
        %v1489 = vtanh.pop %v1426
        %v1490 = vtanh.pop %v1427
        %v1491 = vtanh.pop %v1428
        %v1492 = vtanh.pop %v1429
        %v1493 = vtanh.pop %v1430
        %v1494 = vtanh.pop %v1431
        %v1495 = vtanh.pop %v1432
        %v1496 = vtanh.pop %v1433
        %v1497 = vtanh.pop %v1434
        %v1498 = vtanh.pop %v1435
        %v1499 = vtanh.pop %v1436
        %v1500 = vtanh.pop %v1437
        %v1501 = vtanh.pop %v1438
        %v1502 = vtanh.pop %v1439
        %v1503 = vtanh.pop %v1440
        %v1504 = vtanh.pop %v1441
        %v1505 = vtanh.pop %v1442
        %v1506 = vtanh.pop %v1443
        %v1507 = vtanh.pop %v1444
        %v1508 = vtanh.pop %v1445
        %v1509 = vtanh.pop %v1446
        %v1510 = vtanh.pop %v1447
        %v1511 = vtanh.pop %v1448
        %v1512 = vtanh.pop %v1449
        %v1513 = vtanh.pop %v1450
        %v1514 = vtanh.pop %v1451
        %v1515 = vtanh.pop %v1452
        %v1516 = vtanh.pop %v1453
        %v1517 = vtanh.pop %v1454
        %v1518 = vtanh.pop %v1455
        %v1519 = vtanh.pop %v1456
        %v1520 = vtanh.pop %v1457
        %v1521 = vtanh.pop %v1458
        %v1522 = vtanh.pop %v1459
        %v1523 = vtanh.pop %v1460
        %v1524 = vtanh.pop %v1461
        %v1525 = vtanh.pop %v1462
        %v1526 = vtanh.pop %v1463
        %v1527 = vtanh.pop %v1464
        %v1528 = vtanh.pop %v1465
        %v1529 = vtanh.pop %v1466
        %v1530 = vmul.f32 %v1467, 0.5
        %v1531 = vmul.f32 %v1468, 0.5
        %v1532 = vmul.f32 %v1469, 0.5
        %v1533 = vmul.f32 %v1470, 0.5
        %v1534 = vmul.f32 %v1471, 0.5
        %v1535 = vmul.f32 %v1472, 0.5
        %v1536 = vmul.f32 %v1473, 0.5
        %v1537 = vmul.f32 %v1474, 0.5
        %v1538 = vmul.f32 %v1475, 0.5
        %v1539 = vmul.f32 %v1476, 0.5
        %v1540 = vmul.f32 %v1477, 0.5
        %v1541 = vmul.f32 %v1478, 0.5
        %v1542 = vmul.f32 %v1479, 0.5
        %v1543 = vmul.f32 %v1480, 0.5
        %v1544 = vmul.f32 %v1481, 0.5
        %v1545 = vmul.f32 %v1482, 0.5
        %v1546 = vmul.f32 %v1483, 0.5
        %v1547 = vmul.f32 %v1484, 0.5
        %v1548 = vmul.f32 %v1485, 0.5
        %v1549 = vmul.f32 %v1486, 0.5
        %v1550 = vmul.f32 %v1487, 0.5
        %v1551 = vmul.f32 %v1488, 0.5
        %v1552 = vmul.f32 %v1489, 0.5
        %v1553 = vmul.f32 %v1490, 0.5
        %v1554 = vmul.f32 %v1491, 0.5
        %v1555 = vmul.f32 %v1492, 0.5
        %v1556 = vmul.f32 %v1493, 0.5
        %v1557 = vmul.f32 %v1494, 0.5
        %v1558 = vmul.f32 %v1495, 0.5
        %v1559 = vmul.f32 %v1496, 0.5
        %v1560 = vmul.f32 %v1497, 0.5
        %v1561 = vmul.f32 %v1498, 0.5
        %v1562 = vmul.f32 %v1499, 0.5
        %v1563 = vmul.f32 %v1500, 0.5
        %v1564 = vmul.f32 %v1501, 0.5
        %v1565 = vmul.f32 %v1502, 0.5
        %v1566 = vmul.f32 %v1503, 0.5
        %v1567 = vmul.f32 %v1504, 0.5
        %v1568 = vmul.f32 %v1505, 0.5
        %v1569 = vmul.f32 %v1506, 0.5
        %v1570 = vmul.f32 %v1507, 0.5
        %v1571 = vmul.f32 %v1508, 0.5
        %v1572 = vmul.f32 %v1509, 0.5
        %v1573 = vmul.f32 %v1510, 0.5
        %v1574 = vmul.f32 %v1511, 0.5
        %v1575 = vmul.f32 %v1512, 0.5
        %v1576 = vmul.f32 %v1513, 0.5
        %v1577 = vmul.f32 %v1514, 0.5
        %v1578 = vmul.f32 %v1515, 0.5
        %v1579 = vmul.f32 %v1516, 0.5
        %v1580 = vmul.f32 %v1517, 0.5
        %v1581 = vmul.f32 %v1518, 0.5
        %v1582 = vmul.f32 %v1519, 0.5
        %v1583 = vmul.f32 %v1520, 0.5
        %v1584 = vmul.f32 %v1521, 0.5
        %v1585 = vmul.f32 %v1522, 0.5
        %v1586 = vmul.f32 %v1523, 0.5
        %v1587 = vmul.f32 %v1524, 0.5
        %v1588 = vmul.f32 %v1525, 0.5
        %v1589 = vmul.f32 %v1526, 0.5
        %v1590 = vmul.f32 %v1527, 0.5
        %v1591 = vmul.f32 %v1528, 0.5
        %v1592 = vmul.f32 %v1529, 0.5
        %v1593 = vadd.f32 %v1530, 0.5
        %v1594 = vadd.f32 %v1531, 0.5
        %v1595 = vadd.f32 %v1532, 0.5
        %v1596 = vadd.f32 %v1533, 0.5
        %v1597 = vadd.f32 %v1534, 0.5
        %v1598 = vadd.f32 %v1535, 0.5
        %v1599 = vadd.f32 %v1536, 0.5
        %v1600 = vadd.f32 %v1537, 0.5
        %v1601 = vadd.f32 %v1538, 0.5
        %v1602 = vadd.f32 %v1539, 0.5
        %v1603 = vadd.f32 %v1540, 0.5
        %v1604 = vadd.f32 %v1541, 0.5
        %v1605 = vadd.f32 %v1542, 0.5
        %v1606 = vadd.f32 %v1543, 0.5
        %v1607 = vadd.f32 %v1544, 0.5
        %v1608 = vadd.f32 %v1545, 0.5
        %v1609 = vadd.f32 %v1546, 0.5
        %v1610 = vadd.f32 %v1547, 0.5
        %v1611 = vadd.f32 %v1548, 0.5
        %v1612 = vadd.f32 %v1549, 0.5
        %v1613 = vadd.f32 %v1550, 0.5
        %v1614 = vadd.f32 %v1551, 0.5
        %v1615 = vadd.f32 %v1552, 0.5
        %v1616 = vadd.f32 %v1553, 0.5
        %v1617 = vadd.f32 %v1554, 0.5
        %v1618 = vadd.f32 %v1555, 0.5
        %v1619 = vadd.f32 %v1556, 0.5
        %v1620 = vadd.f32 %v1557, 0.5
        %v1621 = vadd.f32 %v1558, 0.5
        %v1622 = vadd.f32 %v1559, 0.5
        %v1623 = vadd.f32 %v1560, 0.5
        %v1624 = vadd.f32 %v1561, 0.5
        %v1625 = vadd.f32 %v1562, 0.5
        %v1626 = vadd.f32 %v1563, 0.5
        %v1627 = vadd.f32 %v1564, 0.5
        %v1628 = vadd.f32 %v1565, 0.5
        %v1629 = vadd.f32 %v1566, 0.5
        %v1630 = vadd.f32 %v1567, 0.5
        %v1631 = vadd.f32 %v1568, 0.5
        %v1632 = vadd.f32 %v1569, 0.5
        %v1633 = vadd.f32 %v1570, 0.5
        %v1634 = vadd.f32 %v1571, 0.5
        %v1635 = vadd.f32 %v1572, 0.5
        %v1636 = vadd.f32 %v1573, 0.5
        %v1637 = vadd.f32 %v1574, 0.5
        %v1638 = vadd.f32 %v1575, 0.5
        %v1639 = vadd.f32 %v1576, 0.5
        %v1640 = vadd.f32 %v1577, 0.5
        %v1641 = vadd.f32 %v1578, 0.5
        %v1642 = vadd.f32 %v1579, 0.5
        %v1643 = vadd.f32 %v1580, 0.5
        %v1644 = vadd.f32 %v1581, 0.5
        %v1645 = vadd.f32 %v1582, 0.5
        %v1646 = vadd.f32 %v1583, 0.5
        %v1647 = vadd.f32 %v1584, 0.5
        %v1648 = vadd.f32 %v1585, 0.5
        %v1649 = vadd.f32 %v1586, 0.5
        %v1650 = vadd.f32 %v1587, 0.5
        %v1651 = vadd.f32 %v1588, 0.5
        %v1652 = vadd.f32 %v1589, 0.5
        %v1653 = vadd.f32 %v1590, 0.5
        %v1654 = vadd.f32 %v1591, 0.5
        %v1655 = vadd.f32 %v1592, 0.5
        %v1656 = vmul.f32 %v1151, %v1593
        %v1657 = vmul.f32 %v1154, %v1594
        %v1658 = vmul.f32 %v1159, %v1595
        %v1659 = vmul.f32 %v1162, %v1596
        %v1660 = vmul.f32 %v1167, %v1597
        %v1661 = vmul.f32 %v1170, %v1598
        %v1662 = vmul.f32 %v1175, %v1599
        %v1663 = vmul.f32 %v1178, %v1600
        %v1664 = vmul.f32 %v1183, %v1601
        %v1665 = vmul.f32 %v1186, %v1602
        %v1666 = vmul.f32 %v1191, %v1603
        %v1667 = vmul.f32 %v1194, %v1604
        %v1668 = vmul.f32 %v1199, %v1605
        %v1669 = vmul.f32 %v1202, %v1606
        %v1670 = vmul.f32 %v1207, %v1607
        %v1671 = vmul.f32 %v1210, %v1608
        %v1672 = vmul.f32 %v1215, %v1609
        %v1673 = vmul.f32 %v1218, %v1610
        %v1674 = vmul.f32 %v1223, %v1611
        %v1675 = vmul.f32 %v1226, %v1612
        %v1676 = vmul.f32 %v1231, %v1613
        %v1677 = vmul.f32 %v1234, %v1614
        %v1678 = vmul.f32 %v1239, %v1615
        %v1679 = vmul.f32 %v1242, %v1616
        %v1680 = vmul.f32 %v1247, %v1617
        %v1681 = vmul.f32 %v1250, %v1618
        %v1682 = vmul.f32 %v1255, %v1619
        %v1683 = vmul.f32 %v1258, %v1620
        %v1684 = vmul.f32 %v1263, %v1621
        %v1685 = vmul.f32 %v1266, %v1622
        %v1686 = vmul.f32 %v1271, %v1623
        %v1687 = vmul.f32 %v1274, %v1624
        %v1688 = vmul.f32 %v1279, %v1625
        %v1689 = vmul.f32 %v1282, %v1626
        %v1690 = vmul.f32 %v1287, %v1627
        %v1691 = vmul.f32 %v1290, %v1628
        %v1692 = vmul.f32 %v1295, %v1629
        %v1693 = vmul.f32 %v1298, %v1630
        %v1694 = vmul.f32 %v1303, %v1631
        %v1695 = vmul.f32 %v1306, %v1632
        %v1696 = vmul.f32 %v1311, %v1633
        %v1697 = vmul.f32 %v1314, %v1634
        %v1698 = vmul.f32 %v1319, %v1635
        %v1699 = vmul.f32 %v1322, %v1636
        %v1700 = vmul.f32 %v1327, %v1637
        %v1701 = vmul.f32 %v1330, %v1638
        %v1702 = vmul.f32 %v1335, %v1639
        %v1703 = vmul.f32 %v1338, %v1640
        %v1704 = vmul.f32 %v1343, %v1641
        %v1705 = vmul.f32 %v1346, %v1642
        %v1706 = vmul.f32 %v1351, %v1643
        %v1707 = vmul.f32 %v1354, %v1644
        %v1708 = vmul.f32 %v1359, %v1645
        %v1709 = vmul.f32 %v1362, %v1646
        %v1710 = vmul.f32 %v1367, %v1647
        %v1711 = vmul.f32 %v1370, %v1648
        %v1712 = vmul.f32 %v1375, %v1649
        %v1713 = vmul.f32 %v1378, %v1650
        %v1714 = vmul.f32 %v1383, %v1651
        %v1715 = vmul.f32 %v1386, %v1652
        %v1716 = vmul.f32 %v1391, %v1653
        %v1717 = vmul.f32 %v1394, %v1654
        %v1718 = vmul.f32 %v1399, %v1655
        %v1719 = vadd.f32 %v248, %v1656
        %v1720 = vadd.f32 %v249, %v1657
        %v1721 = vadd.f32 %v250, %v1658
        %v1722 = vadd.f32 %v251, %v1659
        %v1723 = vadd.f32 %v252, %v1660
        %v1724 = vadd.f32 %v253, %v1661
        %v1725 = vadd.f32 %v254, %v1662
        %v1726 = vadd.f32 %v255, %v1663
        %v1727 = vadd.f32 %v256, %v1664
        %v1728 = vadd.f32 %v257, %v1665
        %v1729 = vadd.f32 %v258, %v1666
        %v1730 = vadd.f32 %v259, %v1667
        %v1731 = vadd.f32 %v260, %v1668
        %v1732 = vadd.f32 %v261, %v1669
        %v1733 = vadd.f32 %v262, %v1670
        %v1734 = vadd.f32 %v263, %v1671
        %v1735 = vadd.f32 %v264, %v1672
        %v1736 = vadd.f32 %v265, %v1673
        %v1737 = vadd.f32 %v266, %v1674
        %v1738 = vadd.f32 %v267, %v1675
        %v1739 = vadd.f32 %v268, %v1676
        %v1740 = vadd.f32 %v269, %v1677
        %v1741 = vadd.f32 %v270, %v1678
        %v1742 = vadd.f32 %v271, %v1679
        %v1743 = vadd.f32 %v272, %v1680
        %v1744 = vadd.f32 %v273, %v1681
        %v1745 = vadd.f32 %v274, %v1682
        %v1746 = vadd.f32 %v275, %v1683
        %v1747 = vadd.f32 %v276, %v1684
        %v1748 = vadd.f32 %v277, %v1685
        %v1749 = vadd.f32 %v278, %v1686
        %v1750 = vadd.f32 %v279, %v1687
        %v1751 = vadd.f32 %v280, %v1688
        %v1752 = vadd.f32 %v281, %v1689
        %v1753 = vadd.f32 %v282, %v1690
        %v1754 = vadd.f32 %v283, %v1691
        %v1755 = vadd.f32 %v284, %v1692
        %v1756 = vadd.f32 %v285, %v1693
        %v1757 = vadd.f32 %v286, %v1694
        %v1758 = vadd.f32 %v287, %v1695
        %v1759 = vadd.f32 %v288, %v1696
        %v1760 = vadd.f32 %v289, %v1697
        %v1761 = vadd.f32 %v290, %v1698
        %v1762 = vadd.f32 %v291, %v1699
        %v1763 = vadd.f32 %v292, %v1700
        %v1764 = vadd.f32 %v293, %v1701
        %v1765 = vadd.f32 %v294, %v1702
        %v1766 = vadd.f32 %v295, %v1703
        %v1767 = vadd.f32 %v296, %v1704
        %v1768 = vadd.f32 %v297, %v1705
        %v1769 = vadd.f32 %v298, %v1706
        %v1770 = vadd.f32 %v299, %v1707
        %v1771 = vadd.f32 %v300, %v1708
        %v1772 = vadd.f32 %v301, %v1709
        %v1773 = vadd.f32 %v302, %v1710
        %v1774 = vadd.f32 %v303, %v1711
        %v1775 = vadd.f32 %v304, %v1712
        %v1776 = vadd.f32 %v305, %v1713
        %v1777 = vadd.f32 %v306, %v1714
        %v1778 = vadd.f32 %v307, %v1715
        %v1779 = vadd.f32 %v308, %v1716
        %v1780 = vadd.f32 %v309, %v1717
        %v1781 = vadd.f32 %v310, %v1718
        %1782 = vst [vmem:[%s244] sm:$0xff] %v1719
        %1783 = vst [vmem:[%s244 + $0x8] sm:$0xff] %v1720
        %1784 = vst [vmem:[%s244 + $0x10] sm:$0xff] %v1721
        %1785 = vst [vmem:[%s244 + $0x18] sm:$0xff] %v1722
        %1786 = vst [vmem:[%s244 + $0x20] sm:$0xff] %v1723
        %1787 = vst [vmem:[%s244 + $0x28] sm:$0xff] %v1724
        %1788 = vst [vmem:[%s244 + $0x30] sm:$0xff] %v1725
        %1789 = vst [vmem:[%s244 + $0x38] sm:$0xff] %v1726
        %1790 = vst [vmem:[%s244 + $0x40] sm:$0xff] %v1727
        %1791 = vst [vmem:[%s244 + $0x48] sm:$0xff] %v1728
        %1792 = vst [vmem:[%s244 + $0x50] sm:$0xff] %v1729
        %1793 = vst [vmem:[%s244 + $0x58] sm:$0xff] %v1730
        %1794 = vst [vmem:[%s244 + $0x60] sm:$0xff] %v1731
        %1795 = vst [vmem:[%s244 + $0x68] sm:$0xff] %v1732
        %1796 = vst [vmem:[%s244 + $0x70] sm:$0xff] %v1733
        %1797 = vst [vmem:[%s244 + $0x78] sm:$0xff] %v1734
        %1798 = vst [vmem:[%s244 + $0x80] sm:$0xff] %v1735
        %1799 = vst [vmem:[%s244 + $0x88] sm:$0xff] %v1736
        %1800 = vst [vmem:[%s244 + $0x90] sm:$0xff] %v1737
        %1801 = vst [vmem:[%s244 + $0x98] sm:$0xff] %v1738
        %1802 = vst [vmem:[%s244 + $0xa0] sm:$0xff] %v1739
        %1803 = vst [vmem:[%s244 + $0xa8] sm:$0xff] %v1740
        %1804 = vst [vmem:[%s244 + $0xb0] sm:$0xff] %v1741
        %1805 = vst [vmem:[%s244 + $0xb8] sm:$0xff] %v1742
        %1806 = vst [vmem:[%s244 + $0xc0] sm:$0xff] %v1743
        %1807 = vst [vmem:[%s244 + $0xc8] sm:$0xff] %v1744
        %1808 = vst [vmem:[%s244 + $0xd0] sm:$0xff] %v1745
        %1809 = vst [vmem:[%s244 + $0xd8] sm:$0xff] %v1746
        %1810 = vst [vmem:[%s244 + $0xe0] sm:$0xff] %v1747
        %1811 = vst [vmem:[%s244 + $0xe8] sm:$0xff] %v1748
        %1812 = vst [vmem:[%s244 + $0xf0] sm:$0xff] %v1749
        %1813 = vst [vmem:[%s244 + $0xf8] sm:$0xff] %v1750
        %1814 = vst [vmem:[%s244 + $0x100] sm:$0xff] %v1751
        %1815 = vst [vmem:[%s244 + $0x108] sm:$0xff] %v1752
        %1816 = vst [vmem:[%s244 + $0x110] sm:$0xff] %v1753
        %1817 = vst [vmem:[%s244 + $0x118] sm:$0xff] %v1754
        %1818 = vst [vmem:[%s244 + $0x120] sm:$0xff] %v1755
        %1819 = vst [vmem:[%s244 + $0x128] sm:$0xff] %v1756
        %1820 = vst [vmem:[%s244 + $0x130] sm:$0xff] %v1757
        %1821 = vst [vmem:[%s244 + $0x138] sm:$0xff] %v1758
        %1822 = vst [vmem:[%s244 + $0x140] sm:$0xff] %v1759
        %1823 = vst [vmem:[%s244 + $0x148] sm:$0xff] %v1760
        %1824 = vst [vmem:[%s244 + $0x150] sm:$0xff] %v1761
        %1825 = vst [vmem:[%s244 + $0x158] sm:$0xff] %v1762
        %1826 = vst [vmem:[%s244 + $0x160] sm:$0xff] %v1763
        %1827 = vst [vmem:[%s244 + $0x168] sm:$0xff] %v1764
        %1828 = vst [vmem:[%s244 + $0x170] sm:$0xff] %v1765
        %1829 = vst [vmem:[%s244 + $0x178] sm:$0xff] %v1766
        %1830 = vst [vmem:[%s244 + $0x180] sm:$0xff] %v1767
        %1831 = vst [vmem:[%s244 + $0x188] sm:$0xff] %v1768
        %1832 = vst [vmem:[%s244 + $0x190] sm:$0xff] %v1769
        %1833 = vst [vmem:[%s244 + $0x198] sm:$0xff] %v1770
        %1834 = vst [vmem:[%s244 + $0x1a0] sm:$0xff] %v1771
        %1835 = vst [vmem:[%s244 + $0x1a8] sm:$0xff] %v1772
        %1836 = vst [vmem:[%s244 + $0x1b0] sm:$0xff] %v1773
        %1837 = vst [vmem:[%s244 + $0x1b8] sm:$0xff] %v1774
        %1838 = vst [vmem:[%s244 + $0x1c0] sm:$0xff] %v1775
        %1839 = vst [vmem:[%s244 + $0x1c8] sm:$0xff] %v1776
        %1840 = vst [vmem:[%s244 + $0x1d0] sm:$0xff] %v1777
        %1841 = vst [vmem:[%s244 + $0x1d8] sm:$0xff] %v1778
        %1842 = vst [vmem:[%s244 + $0x1e0] sm:$0xff] %v1779
        %1843 = vst [vmem:[%s244 + $0x1e8] sm:$0xff] %v1780
        %1844 = vst [vmem:[%s244 + $0x1f0] sm:$0xff] %v1781
        %s1845 = sand.u32 %s119, 1
        %s1846 = scalar_lea.sflag [#allocation4], %s1845
        %s1847 = sand.u32 %s119, 1
        %s1848 = smul.addr %s1847, 504
        %s1849 = scalar_lea.vmem [#allocation8], %s1848
        // Predicated region
        $region49: #{tpu_custom_call.1} parent=35 // pred_check
          %p1850 = pneg %p129
        $region50: #{tpu_custom_call.1} parent=35 // pred_check_branch
          %1852 = sbr.rel (%p1850) target = $region52
        $region51: #{tpu_custom_call.1} parent=35 // pred_region
          %s1853 = smul.u32 63, %s22
          %s1855 = ssub.s32 8064, 8064
          %1856 = vsyncadd %s1846, %s1855
          %s1857 = smul.addr %s1853, 128
          %s1858 = scalar_lea.hbm %s4, %s1857
          %s1859 = sshll.u32 %s1849, 4
          %s1860 = int_to_ptr.vmem [resolvable:$true] %s1859
          %1865 = dma.vmem_to_hbm [thread:$0]  %s1860, 8064, %s1858, %s1846, 128, 128, 8
        $region52: #{tpu_custom_call.1} parent=35 // pred_fallthru
          _
      $region36: #{tpu_custom_call.1} parent=5 // pred_fallthru
        _
      %p1866 = scmp.le.s32.totalorder 2, %s17
      // Predicated region
      $region53: #{tpu_custom_call.1} parent=5 // pred_check
        %p1867 = pneg %p1866
      $region54: #{tpu_custom_call.1} parent=5 // pred_check_branch
        %1869 = sbr.rel (%p1867) target = $region56
      $region55: #{tpu_custom_call.1} parent=5 // pred_region
        %s1870 = ssub.s32 %s17, 2
        // Predicated region
        $region57: #{tpu_custom_call.1} parent=55 // pred_check
          %p1871 = pneg %p135
        $region58: #{tpu_custom_call.1} parent=55 // pred_check_branch
          %1873 = sbr.rel (%p1871) target = $region60
        $region59: #{tpu_custom_call.1} parent=55 // pred_region
          %s1874 = sand.u32 %s120, 1
          %s1875 = scalar_lea.sflag [#allocation4], %s1874
          %s1876 = sand.u32 %s120, 1
          %s1877 = smul.addr %s1876, 504
          %s1878 = scalar_lea.vmem [#allocation8], %s1877
          %1879 = dma.done %s1875, 8064
        $region60: #{tpu_custom_call.1} parent=55 // pred_fallthru
          _
      $region56: #{tpu_custom_call.1} parent=5 // pred_fallthru
        _
    $region6: #{tpu_custom_call.1} parent=1 // loop_footer
      %s21 = sadd.s32 1, %s17
    $region7: #{tpu_custom_call.1} parent=1 // loop_footer_branch
      %16 = sbr.rel target = $region3
    $region8: #{tpu_custom_call.1} parent=1 // loop_exit
      _
    %1880 = vsyncpa [#allocation3], 1
    %s1881 = scalar_lea.sflag [#allocation3], 1
    %1882 = vsyncpa %s1881, 1
    %1883 = vsyncpa [#allocation6], 1
    %1884 = vsyncpa [#allocation4], 1
    %s1885 = scalar_lea.sflag [#allocation4], 1
    %1886 = vsyncpa %s1885, 1

</llo_original>
